<compile_context>
chip_gen: v5e
topology: v5e:2x2
jax: 0.10.0
libtpu: 0.0.40
codegen_flags: <defaults>
</compile_context>

<pallas_src>
import functools
import math

import jax
import jax.numpy as jnp
from jax.experimental import pallas as pl
from jax.experimental.pallas import tpu as pltpu

H = 196    # true hidden width (14 * 14)
O = 10     # true number of classes
HP = 256   # hidden width padded to 2 full 128-lane groups
OP = 128   # class dim padded to one full lane tile

_NEG_BIG = -1.0e30   # fcout bias pad value -> pad lanes vanish in log_softmax


# ----------------------------- small helpers ------------------------------ #

def _round_up(x, m):
    return ((x + m - 1) // m) * m


def _pad2(x, rows, cols):
    return jnp.zeros((rows, cols), x.dtype).at[:x.shape[0], :x.shape[1]].set(x)


def _act(x, linear):
    return x if linear else jnp.maximum(x, 0.0)


def _log_softmax(x):
    m = jnp.max(x, axis=-1, keepdims=True)
    s = x - m
    return s - jnp.log(jnp.sum(jnp.exp(s), axis=-1, keepdims=True))


def _bf16(x):
    return x.astype(jnp.bfloat16)


def _dot32(x, w):
    return jnp.dot(x, w, preferred_element_type=jnp.float32)


def _dot_hi(x, w):
    # pure-f32 reference matmul (force the high-precision path on TPU)
    return jnp.dot(x, w, precision=jax.lax.Precision.HIGHEST)


def _const_spec(arr, grid_rank):
    """Whole-array block with a constant index map -> DMA'd once, resident.

    (pipeline_mode=pl.Buffered(1) would drop the second buffer and save ~1 MiB
    of VMEM; left at the default since VMEM is nowhere near the limit here.)"""
    zeros = (0,) * arr.ndim
    if grid_rank == 1:
        return pl.BlockSpec(arr.shape, lambda bi: zeros)
    return pl.BlockSpec(arr.shape, lambda bi, t: zeros)


# ----------------------------- kernel math --------------------------------- #

def _full_step_math(i, a, b, c,
                    win, bin_, wab, bab, wba, bba, wbc, bbc, wcb, bcb,
                    wba_g, wcb_g,
                    gamma, beta, alpha_bs, recon_scale):
    """One predictive-coding update.  a/b/c are already activated (f32).

    All matmuls are bf16 x bf16 -> f32 on the MXU (single pass on every
    generation).  The analytic MSE gradients use bf16 (out, in)-oriented weight
    copies and bf16-cast residuals; gamma/beta blending, scaling and the state
    itself stay in f32.
    """
    # fc_in is independent of the recon chain -> issued first so the MXU stays
    # fed during the recon pop -> subtract -> push gap.
    fc_in = _dot32(_bf16(i), win) + bin_
    fc_ba_b = _dot32(_bf16(b), wba) + bba
    fc_cb_c = _dot32(_bf16(c), wcb) + bcb

    # d mse(fcBA(b), a) / d b  and  d mse(fcCB(c), b) / d c  (closed form)
    recon_a = recon_scale * _dot32(_bf16(fc_ba_b - a), wba_g)
    recon_b = recon_scale * _dot32(_bf16(fc_cb_c - b), wcb_g)

    a_new = gamma * fc_in + (1.0 - gamma - beta) * a + beta * fc_ba_b

    fc_ab = _dot32(_bf16(a_new), wab) + bab
    b_new = (gamma * fc_ab + (1.0 - gamma - beta) * b + beta * fc_cb_c
             - alpha_bs * recon_a)

    fc_bc = _dot32(_bf16(b_new), wbc) + bbc
    c_new = gamma * fc_bc + (1.0 - gamma) * c - alpha_bs * recon_b

    return a_new, b_new, c_new, recon_a, recon_b


# ------------------------------- kernels ----------------------------------- #

def _forward_kernel(i_ref,
                    win_ref, bin_ref, wab_ref, bab_ref, wbc_ref, bbc_ref,
                    wout_ref, bout_ref,
                    out_ref, anew_ref, bnew_ref, cnew_ref, onew_ref,
                    *, linear):
    a_new = _act(_dot32(_bf16(i_ref[...]), win_ref[...]) + bin_ref[...], linear)
    b_new = _act(_dot32(_bf16(a_new), wab_ref[...]) + bab_ref[...], linear)
    c_new = _act(_dot32(_bf16(b_new), wbc_ref[...]) + bbc_ref[...], linear)
    o_new = _dot32(_bf16(c_new), wout_ref[...]) + bout_ref[...]
    anew_ref[...] = a_new
    bnew_ref[...] = b_new
    cnew_ref[...] = c_new
    onew_ref[...] = o_new
    out_ref[...] = _log_softmax(o_new)


def _full_kernel(i_ref, a_ref, b_ref, c_ref,
                 win_ref, bin_ref, wab_ref, bab_ref, wba_ref, bba_ref,
                 wbc_ref, bbc_ref, wcb_ref, bcb_ref, wbag_ref, wcbg_ref,
                 wout_ref, bout_ref,
                 out_ref, anew_ref, bnew_ref, cnew_ref, onew_ref,
                 ra_ref, rb_ref,
                 *, gamma, beta, alpha_bs, recon_scale, linear):
    a = _act(a_ref[...], linear)
    b = _act(b_ref[...], linear)
    c = _act(c_ref[...], linear)
    a_new, b_new, c_new, recon_a, recon_b = _full_step_math(
        i_ref[...], a, b, c,
        win_ref[...], bin_ref[...], wab_ref[...], bab_ref[...],
        wba_ref[...], bba_ref[...], wbc_ref[...], bbc_ref[...],
        wcb_ref[...], bcb_ref[...], wbag_ref[...], wcbg_ref[...],
        gamma, beta, alpha_bs, recon_scale)
    o_new = _dot32(_bf16(c_new), wout_ref[...]) + bout_ref[...]
    anew_ref[...] = a_new
    bnew_ref[...] = b_new
    cnew_ref[...] = c_new
    onew_ref[...] = o_new
    ra_ref[...] = recon_a
    rb_ref[...] = recon_b
    out_ref[...] = _log_softmax(o_new)


def _full_steps_kernel(i_ref, a0_ref, b0_ref, c0_ref,
                       win_ref, bin_ref, wab_ref, bab_ref, wba_ref, bba_ref,
                       wbc_ref, bbc_ref, wcb_ref, bcb_ref, wbag_ref, wcbg_ref,
                       wout_ref, bout_ref,
                       out_ref, anew_ref, bnew_ref, cnew_ref, onew_ref,
                       ra_ref, rb_ref,
                       *, gamma, beta, alpha_bs, recon_scale, linear):
    """grid = (batch_tiles, T); state carried across the (arbitrary) T axis in
    the resident aNew/bNew/cNew output blocks (which alias the a/b/c HBM
    buffers, so the update is in place)."""
    t = pl.program_id(1)

    @pl.when(t == 0)
    def _seed_state():
        anew_ref[...] = a0_ref[...]
        bnew_ref[...] = b0_ref[...]
        cnew_ref[...] = c0_ref[...]

    a = _act(anew_ref[...], linear)
    b = _act(bnew_ref[...], linear)
    c = _act(cnew_ref[...], linear)
    a_new, b_new, c_new, recon_a, recon_b = _full_step_math(
        i_ref[...], a, b, c,
        win_ref[...], bin_ref[...], wab_ref[...], bab_ref[...],
        wba_ref[...], bba_ref[...], wbc_ref[...], bbc_ref[...],
        wcb_ref[...], bcb_ref[...], wbag_ref[...], wcbg_ref[...],
        gamma, beta, alpha_bs, recon_scale)
    anew_ref[...] = a_new
    bnew_ref[...] = b_new
    cnew_ref[...] = c_new

    @pl.when(t == pl.num_programs(1) - 1)
    def _finalize():
        # Only the final step's reconstructions / logits are returned: skip the
        # intermediate stores entirely (pure vst-slot savings).
        ra_ref[...] = recon_a
        rb_ref[...] = recon_b
        o_new = _dot32(_bf16(c_new), wout_ref[...]) + bout_ref[...]
        onew_ref[...] = o_new
        out_ref[...] = _log_softmax(o_new)


# ----------------------------- module wrapper ------------------------------ #

def _init_linear(key, fan_in, fan_out, pad_in, pad_out, bias_pad=0.0):
    """Torch-like nn.Linear init (U(+-1/sqrt(fan_in))), stored pre-transposed,
    zero-padded to (pad_in, pad_out); weight cast to bf16 for the MXU.  Also
    returns the raw f32 (out, in) weight and bias for the f32 reference."""
    kw, kb = jax.random.split(key)
    bound = 1.0 / math.sqrt(fan_in)
    w = jax.random.uniform(kw, (fan_out, fan_in), jnp.float32, -bound, bound)
    b = jax.random.uniform(kb, (fan_out,), jnp.float32, -bound, bound)
    w_t = jnp.zeros((pad_in, pad_out), jnp.float32).at[:fan_in, :fan_out].set(w.T)
    b_p = jnp.full((1, pad_out), bias_pad, jnp.float32).at[0, :fan_out].set(b)
    return w_t.astype(jnp.bfloat16), b_p, w, b


class PCMLP:
    def __init__(self, memory, alphaRec, betaFB, gammaFw, linear=False, key=None):
        self.memory = float(memory)
        self.alphaRec = float(alphaRec)
        self.betaFB = float(betaFB)
        self.gammaFw = float(gammaFw)
        self.linear = bool(linear)
        if key is None:
            key = jax.random.PRNGKey(0)

        ks = jax.random.split(key, 6)
        self.win_t, self.bin, w_in, b_in = _init_linear(ks[0], H, H, HP, HP)     # fcin
        self.wab_t, self.bab, w_ab, b_ab = _init_linear(ks[1], H, H, HP, HP)     # fcAB
        self.wba_t, self.bba, w_ba, b_ba = _init_linear(ks[2], H, H, HP, HP)     # fcBA
        self.wbc_t, self.bbc, w_bc, b_bc = _init_linear(ks[3], H, H, HP, HP)     # fcBC
        self.wcb_t, self.bcb, w_cb, b_cb = _init_linear(ks[4], H, H, HP, HP)     # fcCB
        self.wout_t, self.bout, w_out, b_out = _init_linear(ks[5], H, O, HP, OP,
                                                            bias_pad=_NEG_BIG)  # fcout
        # bf16 (out, in)-oriented copies for the analytic MSE gradients: both
        # recon matmuls become single-pass bf16 x bf16 MXU ops (f32 x f32 is
        # multi-pass on v5e/v6e) and the resident VMEM/weight DMA is halved.
        self.wba_g = _bf16(jnp.zeros((HP, HP), jnp.float32).at[:H, :H].set(w_ba))
        self.wcb_g = _bf16(jnp.zeros((HP, HP), jnp.float32).at[:H, :H].set(w_cb))
        # f32 master copies: used only by the pure-f32 reference checks.
        self.f32 = dict(win=w_in, bin=b_in, wab=w_ab, bab=b_ab,
                        wba=w_ba, bba=b_ba, wbc=w_bc, bbc=b_bc,
                        wcb=w_cb, bcb=b_cb, wout=w_out, bout=b_out)
        # memoized pallas_call callables keyed by (mode, TB, B_pad, batch[, steps])
        self._call_cache = {}

    # ---------------------------- helpers ---------------------------------- #

    def _full_consts(self, batch):
        sig = lambda x: 1.0 / (1.0 + math.exp(-x))
        if self.betaFB == 0:
            den = sig(self.gammaFw) + sig(self.memory)
            gamma, beta = sig(self.gammaFw) / den, 0.0
        else:
            den = sig(self.gammaFw) + sig(self.betaFB) + sig(self.memory)
            gamma, beta = sig(self.gammaFw) / den, sig(self.betaFB) / den
        return gamma, beta, self.alphaRec * batch, 2.0 / (batch * H)

    @staticmethod
    def _tiling(batch, tb):
        """Default: as few tiles as possible with <=512 rows each (amortizes
        the ~0.35us/grid-step overhead, fills the 256-wide MXU M dim on
        v6e/v7x), rows balanced across tiles and rounded up to 16.  On v5e a
        tb of 128-256 is usually enough; on v7x prefer an even tile count so
        both TensorCores get work (pass tb explicitly if needed)."""
        batch = max(int(batch), 1)
        if tb is None:
            n_tiles = -(-batch // 512)            # ceil(batch / 512)
            tb = -(-batch // n_tiles)             # balanced rows per tile
        tbb = max(16, _round_up(tb, 16))
        b_pad = _round_up(batch, tbb)
        return tbb, b_pad, b_pad // tbb

    def _forward_weights(self):
        return (self.win_t, self.bin, self.wab_t, self.bab,
                self.wbc_t, self.bbc, self.wout_t, self.bout)

    def _full_weights(self):
        return (self.win_t, self.bin, self.wab_t, self.bab,
                self.wba_t, self.bba, self.wbc_t, self.bbc,
                self.wcb_t, self.bcb, self.wba_g, self.wcb_g,
                self.wout_t, self.bout)

    @staticmethod
    def _cost(batch_rows, n_hidden_matmuls, weights, steps=1):
        flops = steps * batch_rows * (2 * HP * HP * n_hidden_matmuls + 2 * HP * OP)
        w_bytes = sum(int(w.size) * w.dtype.itemsize for w in weights)
        io_bytes = 12 * batch_rows * HP * 4
        return pl.CostEstimate(flops=int(flops),
                               transcendentals=int(batch_rows * OP),
                               bytes_accessed=int(w_bytes + io_bytes))

    @staticmethod
    def _vmem_limit_bytes(TB, weights, n_h_io, n_o_io):
        """Scoped-VMEM limit from the actual footprint: double-buffered f32
        row blocks + double-buffered resident weights + scratch headroom.
        Floor 32 MiB, cap 64 MiB (v7x physical VMEM)."""
        blocks = 2 * 4 * TB * (n_h_io * HP + n_o_io * OP)
        wbytes = 2 * sum(int(w.size) * w.dtype.itemsize for w in weights)
        est = blocks + wbytes + (4 << 20)
        return int(min(max(est, 32 << 20), 64 << 20))

    # ----------------------- memoized pallas_call builders ------------------ #

    def _get_forward_call(self, TB, B_pad, nb):
        key = ('forward', TB, B_pad)
        if key in self._call_cache:
            return self._call_cache[key]
        weights = self._forward_weights()
        row_h = pl.BlockSpec((TB, HP), lambda bi: (bi, 0))
        row_o = pl.BlockSpec((TB, OP), lambda bi: (bi, 0))
        call = pl.pallas_call(
            functools.partial(_forward_kernel, linear=self.linear),
            grid=(nb,),
            in_specs=[row_h] + [_const_spec(w, 1) for w in weights],
            out_specs=[row_o, row_h, row_h, row_h, row_o],
            out_shape=[
                jax.ShapeDtypeStruct((B_pad, OP), jnp.float32),  # log_softmax
                jax.ShapeDtypeStruct((B_pad, HP), jnp.float32),  # aNew
                jax.ShapeDtypeStruct((B_pad, HP), jnp.float32),  # bNew
                jax.ShapeDtypeStruct((B_pad, HP), jnp.float32),  # cNew
                jax.ShapeDtypeStruct((B_pad, OP), jnp.float32),  # oNew
            ],
            compiler_params=pltpu.CompilerParams(
                dimension_semantics=("parallel",),
                vmem_limit_bytes=self._vmem_limit_bytes(TB, weights, 4, 2)),
            cost_estimate=self._cost(B_pad, 3, weights),
        )
        self._call_cache[key] = call
        return call

    def _full_out_shapes(self, B_pad):
        return [
            jax.ShapeDtypeStruct((B_pad, OP), jnp.float32),  # log_softmax
            jax.ShapeDtypeStruct((B_pad, HP), jnp.float32),  # aNew
            jax.ShapeDtypeStruct((B_pad, HP), jnp.float32),  # bNew
            jax.ShapeDtypeStruct((B_pad, HP), jnp.float32),  # cNew
            jax.ShapeDtypeStruct((B_pad, OP), jnp.float32),  # oNew
            jax.ShapeDtypeStruct((B_pad, HP), jnp.float32),  # reconstructionA
            jax.ShapeDtypeStruct((B_pad, HP), jnp.float32),  # reconstructionB
        ]

    def _get_full_call(self, TB, B_pad, nb, batch):
        key = ('full', TB, B_pad, batch)
        if key in self._call_cache:
            return self._call_cache[key]
        gamma, beta, alpha_bs, recon_scale = self._full_consts(batch)
        weights = self._full_weights()
        row_h = pl.BlockSpec((TB, HP), lambda bi: (bi, 0))
        row_o = pl.BlockSpec((TB, OP), lambda bi: (bi, 0))
        call = pl.pallas_call(
            functools.partial(_full_kernel, gamma=gamma, beta=beta,
                              alpha_bs=alpha_bs, recon_scale=recon_scale,
                              linear=self.linear),
            grid=(nb,),
            in_specs=[row_h] * 4 + [_const_spec(w, 1) for w in weights],
            out_specs=[row_o, row_h, row_h, row_h, row_o, row_h, row_h],
            out_shape=self._full_out_shapes(B_pad),
            # a/b/c updated in place (padded state buffers are donated)
            input_output_aliases={1: 1, 2: 2, 3: 3},
            compiler_params=pltpu.CompilerParams(
                dimension_semantics=("parallel",),
                vmem_limit_bytes=self._vmem_limit_bytes(TB, weights, 9, 2)),
            cost_estimate=self._cost(B_pad, 7, weights),
        )
        self._call_cache[key] = call
        return call

    def _get_full_steps_call(self, TB, B_pad, nb, batch, steps):
        key = ('full_steps', TB, B_pad, batch, steps)
        if key in self._call_cache:
            return self._call_cache[key]
        gamma, beta, alpha_bs, recon_scale = self._full_consts(batch)
        weights = self._full_weights()
        row_h = pl.BlockSpec((TB, HP), lambda bi, t: (bi, 0))
        row_o = pl.BlockSpec((TB, OP), lambda bi, t: (bi, 0))
        call = pl.pallas_call(
            functools.partial(_full_steps_kernel, gamma=gamma, beta=beta,
                              alpha_bs=alpha_bs, recon_scale=recon_scale,
                              linear=self.linear),
            grid=(nb, steps),
            in_specs=[row_h] * 4 + [_const_spec(w, 2) for w in weights],
            out_specs=[row_o, row_h, row_h, row_h, row_o, row_h, row_h],
            out_shape=self._full_out_shapes(B_pad),
            # a/b/c HBM buffers aliased onto aNew/bNew/cNew (in-place state)
            input_output_aliases={1: 1, 2: 2, 3: 3},
            compiler_params=pltpu.CompilerParams(
                dimension_semantics=("parallel", "arbitrary"),
                vmem_limit_bytes=self._vmem_limit_bytes(TB, weights, 9, 2)),
            cost_estimate=self._cost(B_pad, 7, weights, steps=steps),
        )
        self._call_cache[key] = call
        return call

    # ------------------------- padded-state API ----------------------------- #

    def pad_batch(self, x, tb=None):
        """Pad a (B, <=HP) array to the lane-dense (B_pad, HP) layout."""
        _, b_pad, _ = self._tiling(x.shape[0], tb)
        return _pad2(x, b_pad, HP)

    def forward_full_padded(self, i_p, a_p, b_p, c_p, batch, tb=None):
        """One 'full' update on padded (B_pad, HP) state, returning padded
        (out, aNew, bNew, cNew, oNew, reconA, reconB) — no pad/slice HBM round
        trips.  NOTE: a_p/b_p/c_p are donated (updated in place)."""
        TB, B_pad, nb = self._tiling(batch, tb)
        assert a_p.shape == (B_pad, HP), (a_p.shape, (B_pad, HP))
        call = self._get_full_call(TB, B_pad, nb, batch)
        return call(i_p, a_p, b_p, c_p, *self._full_weights())

    # ---------------------------- forward ----------------------------------- #

    def forward(self, i, a, b, c, o, networkMode, tb=None):
        assert networkMode in ('forward', 'full')
        B = a.shape[0]
        TB, B_pad, nb = self._tiling(B, tb)

        if networkMode == 'forward':
            i_p = _pad2(i, B_pad, HP)
            call = self._get_forward_call(TB, B_pad, nb)
            out, a_new, b_new, c_new, o_new = call(i_p, *self._forward_weights())
            # torch returns empty lists for the reconstructions in this mode
            return (out[:B, :O], i, a_new[:B, :H], b_new[:B, :H],
                    c_new[:B, :H], o_new[:B, :O], [], [])

        # networkMode == 'full'.  (torch also activates `o` here but never uses
        # the result, so it is omitted.)  For PC-iteration loops prefer
        # pad_batch() + forward_full_padded() to skip the pad/slice round trips.
        i_p, a_p, b_p, c_p = (_pad2(x, B_pad, HP) for x in (i, a, b, c))
        outs = self.forward_full_padded(i_p, a_p, b_p, c_p, B, tb=tb)
        out, a_new, b_new, c_new, o_new, ra, rb = outs
        return (out[:B, :O], i, a_new[:B, :H], b_new[:B, :H], c_new[:B, :H],
                o_new[:B, :O], ra[:B, :H], rb[:B, :H])

    def forward_full_steps(self, i, a, b, c, steps, tb=None):
        """Run `steps` consecutive 'full'-mode updates in ONE pallas_call:
        weights resident in VMEM, state carried across the time grid axis
        on-chip and written back in place over the padded a/b/c buffers."""
        assert steps >= 1
        B = a.shape[0]
        TB, B_pad, nb = self._tiling(B, tb)
        i_p, a_p, b_p, c_p = (_pad2(x, B_pad, HP) for x in (i, a, b, c))
        call = self._get_full_steps_call(TB, B_pad, nb, B, steps)
        out, a_new, b_new, c_new, o_new, ra, rb = call(
            i_p, a_p, b_p, c_p, *self._full_weights())
        return (out[:B, :O], i, a_new[:B, :H], b_new[:B, :H], c_new[:B, :H],
                o_new[:B, :O], ra[:B, :H], rb[:B, :H])


# --------------------------- references ------------------------------------ #
# (1) "mirrored" refs replicate the kernel's exact numerics (bf16 MXU operands
#     incl. bf16 gradient weights + residuals, f32 accumulation) on the
#     UNPADDED 196/10 shapes -> tight tolerances, validates the padding logic.
# (2) "f32" refs use the f32 master weights with HIGHEST-precision matmuls ->
#     loose, RMS-scaled tolerances, validates that bf16 error stays bounded.

def _ref_params(m):
    return dict(
        win=m.win_t[:H, :H], bin=m.bin[:, :H],
        wab=m.wab_t[:H, :H], bab=m.bab[:, :H],
        wba=m.wba_t[:H, :H], bba=m.bba[:, :H],
        wbc=m.wbc_t[:H, :H], bbc=m.bbc[:, :H],
        wcb=m.wcb_t[:H, :H], bcb=m.bcb[:, :H],
        wba_g=m.wba_g[:H, :H], wcb_g=m.wcb_g[:H, :H],
        wout=m.wout_t[:H, :O], bout=m.bout[:, :O])


def _ref_forward(m, i):
    p = _ref_params(m)
    act = (lambda x: x) if m.linear else (lambda x: jnp.maximum(x, 0.0))
    a_new = act(_dot32(_bf16(i), p['win']) + p['bin'])
    b_new = act(_dot32(_bf16(a_new), p['wab']) + p['bab'])
    c_new = act(_dot32(_bf16(b_new), p['wbc']) + p['bbc'])
    o_new = _dot32(_bf16(c_new), p['wout']) + p['bout']
    return jax.nn.log_softmax(o_new, axis=-1), a_new, b_new, c_new, o_new


def _ref_full_step(m, i, a, b, c, batch):
    p = _ref_params(m)
    gamma, beta, alpha_bs, recon_scale = m._full_consts(batch)
    act = (lambda x: x) if m.linear else (lambda x: jnp.maximum(x, 0.0))
    a, b, c = act(a), act(b), act(c)
    fc_in = _dot32(_bf16(i), p['win']) + p['bin']
    fc_ba_b = _dot32(_bf16(b), p['wba']) + p['bba']
    fc_cb_c = _dot32(_bf16(c), p['wcb']) + p['bcb']
    recon_a = recon_scale * _dot32(_bf16(fc_ba_b - a), p['wba_g'])
    recon_b = recon_scale * _dot32(_bf16(fc_cb_c - b), p['wcb_g'])
    a_new = gamma * fc_in + (1 - gamma - beta) * a + beta * fc_ba_b
    b_new = (gamma * (_dot32(_bf16(a_new), p['wab']) + p['bab'])
             + (1 - gamma - beta) * b + beta * fc_cb_c - alpha_bs * recon_a)
    c_new = (gamma * (_dot32(_bf16(b_new), p['wbc']) + p['bbc'])
             + (1 - gamma) * c - alpha_bs * recon_b)
    o_new = _dot32(_bf16(c_new), p['wout']) + p['bout']
    return (jax.nn.log_softmax(o_new, axis=-1), a_new, b_new, c_new, o_new,
            recon_a, recon_b)


def _ref_full_step_f32(m, i, a, b, c, batch):
    p = m.f32
    gamma, beta, alpha_bs, recon_scale = m._full_consts(batch)
    act = (lambda x: x) if m.linear else (lambda x: jnp.maximum(x, 0.0))
    a, b, c = act(a), act(b), act(c)
    fc_ba_b = _dot_hi(b, p['wba'].T) + p['bba']
    fc_cb_c = _dot_hi(c, p['wcb'].T) + p['bcb']
    recon_a = recon_scale * _dot_hi(fc_ba_b - a, p['wba'])
    recon_b = recon_scale * _dot_hi(fc_cb_c - b, p['wcb'])
    a_new = (gamma * (_dot_hi(i, p['win'].T) + p['bin'])
             + (1 - gamma - beta) * a + beta * fc_ba_b)
    b_new = (gamma * (_dot_hi(a_new, p['wab'].T) + p['bab'])
             + (1 - gamma - beta) * b + beta * fc_cb_c - alpha_bs * recon_a)
    c_new = (gamma * (_dot_hi(b_new, p['wbc'].T) + p['bbc'])
             + (1 - gamma) * c - alpha_bs * recon_b)
    o_new = _dot_hi(c_new, p['wout'].T) + p['bout']
    return (jax.nn.log_softmax(o_new, axis=-1), a_new, b_new, c_new, o_new,
            recon_a, recon_b)


def _check(name, got, want, rtol=2e-2, atol=5e-4):
    assert got.shape == want.shape, (name, got.shape, want.shape)
    assert jnp.allclose(got, want, rtol=rtol, atol=atol), (
        f"{name}: max abs err {jnp.max(jnp.abs(got - want))}")


def _check_loose(name, got, want, rtol=6e-2):
    """bf16-vs-f32 sanity check; atol scaled by the reference RMS so the check
    stays meaningful for the small-magnitude reconstruction outputs."""
    assert got.shape == want.shape, (name, got.shape, want.shape)
    atol = 0.1 * float(jnp.sqrt(jnp.mean(jnp.square(want)))) + 1e-8
    assert jnp.allclose(got, want, rtol=rtol, atol=atol), (
        f"{name}: max abs err {jnp.max(jnp.abs(got - want))} (atol={atol})")


# --------------------------------- demo ------------------------------------ #

if __name__ == "__main__":
    key = jax.random.PRNGKey(0)
    pkey, dkey = jax.random.split(key)
    model = PCMLP(memory=0.5, alphaRec=0.01, betaFB=0.33, gammaFw=0.33,
                  linear=False, key=pkey)

    B = 40
    ks = jax.random.split(dkey, 5)
    i = jax.random.normal(ks[0], (B, H), jnp.float32)
    a = jax.random.normal(ks[1], (B, H), jnp.float32)
    b = jax.random.normal(ks[2], (B, H), jnp.float32)
    c = jax.random.normal(ks[3], (B, H), jnp.float32)
    o = jax.random.normal(ks[4], (B, O), jnp.float32)

    # ---- 'forward' mode (default tiling: one 48-row tile) ------------------
    res_fwd = model.forward(i, a, b, c, o, 'forward')
    jax.block_until_ready(res_fwd[0])
    ref_fwd = _ref_forward(model, i)
    for name, g, w in zip(("out", "aNew", "bNew", "cNew", "oNew"),
                          (res_fwd[0], res_fwd[2], res_fwd[3],
                           res_fwd[4], res_fwd[5]),
                          ref_fwd):
        _check("forward/" + name, g, w)

    # ---- 'full' mode, multi-tile grid -------------------------------------
    # tb=16 only to exercise the tiled/padded/aliased "parallel" path at demo
    # scale; the production default picks tiles of up to 512 rows.
    TB_SMALL = 16
    res_full = model.forward(i, a, b, c, o, 'full', tb=TB_SMALL)
    jax.block_until_ready(res_full[0])
    got_full = (res_full[0], res_full[2], res_full[3], res_full[4],
                res_full[5], res_full[6], res_full[7])
    names_full = ("out", "aNew", "bNew", "cNew", "oNew", "reconA", "reconB")
    ref_full = _ref_full_step(model, i, a, b, c, B)
    for name, g, w in zip(names_full, got_full, ref_full):
        _check("full/" + name, g, w)
    ref_f32 = _ref_full_step_f32(model, i, a, b, c, B)
    for name, g, w in zip(names_full, got_full, ref_f32):
        _check_loose("full_vs_f32/" + name, g, w)

    # ---- fused multi-step 'full' mode (one pallas_call, T steps) -----------
    T = 3
    res_ms = model.forward_full_steps(i, a, b, c, steps=T)
    jax.block_until_ready(res_ms[0])
    sa, sb, sc = a, b, c
    for _ in range(T):
        ref_step = _ref_full_step(model, i, sa, sb, sc, B)
        sa, sb, sc = ref_step[1], ref_step[2], ref_step[3]
    got_ms = (res_ms[0], res_ms[2], res_ms[3], res_ms[4],
              res_ms[5], res_ms[6], res_ms[7])
    for name, g, w in zip(names_full, got_ms, ref_step):
        _check("fused/" + name, g, w)

    # ---- padded-state API: T single 'full' steps, no pad/slice round trips -
    # Reuses the memoized tb=16 kernel; a/b/c stay in the (B_pad, HP) layout
    # and are updated in place (input_output_aliases).  Must agree with the
    # fused multi-step kernel.
    i_p = model.pad_batch(i, tb=TB_SMALL)
    a_p = model.pad_batch(a, tb=TB_SMALL)
    b_p = model.pad_batch(b, tb=TB_SMALL)
    c_p = model.pad_batch(c, tb=TB_SMALL)
    for _ in range(T):
        out_p, a_p, b_p, c_p, o_p, ra_p, rb_p = model.forward_full_padded(
            i_p, a_p, b_p, c_p, B, tb=TB_SMALL)
    jax.block_until_ready(out_p)
    _check("padded_loop/out", out_p[:B, :O], res_ms[0], rtol=1e-5, atol=1e-5)
    _check("padded_loop/aNew", a_p[:B, :H], res_ms[2], rtol=1e-5, atol=1e-5)
    _check("padded_loop/cNew", c_p[:B, :H], res_ms[4], rtol=1e-5, atol=1e-5)

    print("KERNEL_OK")
</pallas_src>

<mosaic_0001>
module attributes {stable_mosaic.version = 11 : i64} {
  func.func @_forward_kernel(%arg0: i32, %arg1: memref<48x256xf32, #tpu.memory_space<vmem>>, %arg2: memref<256x256xbf16, #tpu.memory_space<vmem>>, %arg3: memref<1x256xf32, #tpu.memory_space<vmem>>, %arg4: memref<256x256xbf16, #tpu.memory_space<vmem>>, %arg5: memref<1x256xf32, #tpu.memory_space<vmem>>, %arg6: memref<256x256xbf16, #tpu.memory_space<vmem>>, %arg7: memref<1x256xf32, #tpu.memory_space<vmem>>, %arg8: memref<256x128xbf16, #tpu.memory_space<vmem>>, %arg9: memref<1x128xf32, #tpu.memory_space<vmem>>, %arg10: memref<48x128xf32, #tpu.memory_space<vmem>>, %arg11: memref<48x256xf32, #tpu.memory_space<vmem>>, %arg12: memref<48x256xf32, #tpu.memory_space<vmem>>, %arg13: memref<48x256xf32, #tpu.memory_space<vmem>>, %arg14: memref<48x128xf32, #tpu.memory_space<vmem>>) attributes {dimension_semantics = [#tpu.dimension_semantics<parallel>], iteration_bounds = array<i64: 1>, scalar_prefetch = 0 : i64, scratch_operands = 0 : i64, tpu.core_type = #tpu.core_type<tc>, window_params = [{transform_indices = @transform_0, window_bounds = array<i64: 48, 256>}, {pipeline_mode = #tpu.pipeline_mode<synchronous>, transform_indices = @transform_1, window_bounds = array<i64: 256, 256>}, {pipeline_mode = #tpu.pipeline_mode<synchronous>, transform_indices = @transform_2, window_bounds = array<i64: 1, 256>}, {pipeline_mode = #tpu.pipeline_mode<synchronous>, transform_indices = @transform_3, window_bounds = array<i64: 256, 256>}, {pipeline_mode = #tpu.pipeline_mode<synchronous>, transform_indices = @transform_4, window_bounds = array<i64: 1, 256>}, {pipeline_mode = #tpu.pipeline_mode<synchronous>, transform_indices = @transform_5, window_bounds = array<i64: 256, 256>}, {pipeline_mode = #tpu.pipeline_mode<synchronous>, transform_indices = @transform_6, window_bounds = array<i64: 1, 256>}, {pipeline_mode = #tpu.pipeline_mode<synchronous>, transform_indices = @transform_7, window_bounds = array<i64: 256, 128>}, {pipeline_mode = #tpu.pipeline_mode<synchronous>, transform_indices = @transform_8, window_bounds = array<i64: 1, 128>}, {transform_indices = @transform_9, window_bounds = array<i64: 48, 128>}, {transform_indices = @transform_10, window_bounds = array<i64: 48, 256>}, {transform_indices = @transform_11, window_bounds = array<i64: 48, 256>}, {transform_indices = @transform_12, window_bounds = array<i64: 48, 256>}, {transform_indices = @transform_13, window_bounds = array<i64: 48, 128>}]} {
    %c0 = arith.constant 0 : index
    %c0_0 = arith.constant 0 : index
    %0 = vector.load %arg1[%c0, %c0_0] : memref<48x256xf32, #tpu.memory_space<vmem>>, vector<48x256xf32>
    %1 = arith.truncf %0 : vector<48x256xf32> to vector<48x256xbf16>
    %c0_1 = arith.constant 0 : index
    %c0_2 = arith.constant 0 : index
    %2 = vector.load %arg2[%c0_1, %c0_2] : memref<256x256xbf16, #tpu.memory_space<vmem>>, vector<256x256xbf16>
    %cst = arith.constant dense<0.000000e+00> : vector<48x256xf32>
    %3 = tpu.matmul %1, %2, %cst {dimension_numbers = #tpu.dot_dimension_numbers<[1], [0], [0], [1], [0, 0, 1, 1], [], []>} : vector<48x256xbf16>, vector<256x256xbf16>, vector<48x256xf32> -> vector<48x256xf32>
    %c0_3 = arith.constant 0 : index
    %c0_4 = arith.constant 0 : index
    %4 = vector.load %arg3[%c0_3, %c0_4] : memref<1x256xf32, #tpu.memory_space<vmem>>, vector<1x256xf32>
    %5 = vector.broadcast %4 : vector<1x256xf32> to vector<48x256xf32>
    %6 = arith.addf %3, %5 : vector<48x256xf32>
    %cst_5 = arith.constant 0.000000e+00 : f32
    %7 = vector.broadcast %cst_5 : f32 to vector<48x256xf32>
    %8 = arith.maximumf %6, %7 : vector<48x256xf32>
    %9 = arith.truncf %8 : vector<48x256xf32> to vector<48x256xbf16>
    %c0_6 = arith.constant 0 : index
    %c0_7 = arith.constant 0 : index
    %10 = vector.load %arg4[%c0_6, %c0_7] : memref<256x256xbf16, #tpu.memory_space<vmem>>, vector<256x256xbf16>
    %cst_8 = arith.constant dense<0.000000e+00> : vector<48x256xf32>
    %11 = tpu.matmul %9, %10, %cst_8 {dimension_numbers = #tpu.dot_dimension_numbers<[1], [0], [0], [1], [0, 0, 1, 1], [], []>} : vector<48x256xbf16>, vector<256x256xbf16>, vector<48x256xf32> -> vector<48x256xf32>
    %c0_9 = arith.constant 0 : index
    %c0_10 = arith.constant 0 : index
    %12 = vector.load %arg5[%c0_9, %c0_10] : memref<1x256xf32, #tpu.memory_space<vmem>>, vector<1x256xf32>
    %13 = vector.broadcast %12 : vector<1x256xf32> to vector<48x256xf32>
    %14 = arith.addf %11, %13 : vector<48x256xf32>
    %cst_11 = arith.constant 0.000000e+00 : f32
    %15 = vector.broadcast %cst_11 : f32 to vector<48x256xf32>
    %16 = arith.maximumf %14, %15 : vector<48x256xf32>
    %17 = arith.truncf %16 : vector<48x256xf32> to vector<48x256xbf16>
    %c0_12 = arith.constant 0 : index
    %c0_13 = arith.constant 0 : index
    %18 = vector.load %arg6[%c0_12, %c0_13] : memref<256x256xbf16, #tpu.memory_space<vmem>>, vector<256x256xbf16>
    %cst_14 = arith.constant dense<0.000000e+00> : vector<48x256xf32>
    %19 = tpu.matmul %17, %18, %cst_14 {dimension_numbers = #tpu.dot_dimension_numbers<[1], [0], [0], [1], [0, 0, 1, 1], [], []>} : vector<48x256xbf16>, vector<256x256xbf16>, vector<48x256xf32> -> vector<48x256xf32>
    %c0_15 = arith.constant 0 : index
    %c0_16 = arith.constant 0 : index
    %20 = vector.load %arg7[%c0_15, %c0_16] : memref<1x256xf32, #tpu.memory_space<vmem>>, vector<1x256xf32>
    %21 = vector.broadcast %20 : vector<1x256xf32> to vector<48x256xf32>
    %22 = arith.addf %19, %21 : vector<48x256xf32>
    %cst_17 = arith.constant 0.000000e+00 : f32
    %23 = vector.broadcast %cst_17 : f32 to vector<48x256xf32>
    %24 = arith.maximumf %22, %23 : vector<48x256xf32>
    %25 = arith.truncf %24 : vector<48x256xf32> to vector<48x256xbf16>
    %c0_18 = arith.constant 0 : index
    %c0_19 = arith.constant 0 : index
    %26 = vector.load %arg8[%c0_18, %c0_19] : memref<256x128xbf16, #tpu.memory_space<vmem>>, vector<256x128xbf16>
    %cst_20 = arith.constant dense<0.000000e+00> : vector<48x128xf32>
    %27 = tpu.matmul %25, %26, %cst_20 {dimension_numbers = #tpu.dot_dimension_numbers<[1], [0], [0], [1], [0, 0, 1, 1], [], []>} : vector<48x256xbf16>, vector<256x128xbf16>, vector<48x128xf32> -> vector<48x128xf32>
    %c0_21 = arith.constant 0 : index
    %c0_22 = arith.constant 0 : index
    %28 = vector.load %arg9[%c0_21, %c0_22] : memref<1x128xf32, #tpu.memory_space<vmem>>, vector<1x128xf32>
    %29 = vector.broadcast %28 : vector<1x128xf32> to vector<48x128xf32>
    %30 = arith.addf %27, %29 : vector<48x128xf32>
    %c0_23 = arith.constant 0 : index
    %c0_24 = arith.constant 0 : index
    %31 = vector.load %arg11[%c0_23, %c0_24] : memref<48x256xf32, #tpu.memory_space<vmem>>, vector<48x256xf32>
    tpu.vector_store %arg11[%c0_23, %c0_24], %8 {strides = array<i32>} : memref<48x256xf32, #tpu.memory_space<vmem>>, vector<48x256xf32>,
    %c0_25 = arith.constant 0 : index
    %c0_26 = arith.constant 0 : index
    %32 = vector.load %arg12[%c0_25, %c0_26] : memref<48x256xf32, #tpu.memory_space<vmem>>, vector<48x256xf32>
    tpu.vector_store %arg12[%c0_25, %c0_26], %16 {strides = array<i32>} : memref<48x256xf32, #tpu.memory_space<vmem>>, vector<48x256xf32>,
    %c0_27 = arith.constant 0 : index
    %c0_28 = arith.constant 0 : index
    %33 = vector.load %arg13[%c0_27, %c0_28] : memref<48x256xf32, #tpu.memory_space<vmem>>, vector<48x256xf32>
    tpu.vector_store %arg13[%c0_27, %c0_28], %24 {strides = array<i32>} : memref<48x256xf32, #tpu.memory_space<vmem>>, vector<48x256xf32>,
    %c0_29 = arith.constant 0 : index
    %c0_30 = arith.constant 0 : index
    %34 = vector.load %arg14[%c0_29, %c0_30] : memref<48x128xf32, #tpu.memory_space<vmem>>, vector<48x128xf32>
    tpu.vector_store %arg14[%c0_29, %c0_30], %30 {strides = array<i32>} : memref<48x128xf32, #tpu.memory_space<vmem>>, vector<48x128xf32>,
    %cst_31 = arith.constant dense<0xFF800000> : vector<48xf32>
    %35 = vector.multi_reduction <maximumf>, %30, %cst_31 [1] : vector<48x128xf32> to vector<48xf32>
    %36 = vector.shape_cast %35 : vector<48xf32> to vector<48x1xf32>
    %37 = vector.broadcast %36 : vector<48x1xf32> to vector<48x128xf32>
    %38 = arith.subf %30, %37 : vector<48x128xf32>
    %39 = math.exp %38 : vector<48x128xf32>
    %cst_32 = arith.constant dense<0.000000e+00> : vector<48xf32>
    %40 = vector.multi_reduction <add>, %39, %cst_32 [1] : vector<48x128xf32> to vector<48xf32>
    %41 = vector.shape_cast %40 : vector<48xf32> to vector<48x1xf32>
    %42 = math.log %41 : vector<48x1xf32>
    %43 = vector.broadcast %42 : vector<48x1xf32> to vector<48x128xf32>
    %44 = arith.subf %38, %43 : vector<48x128xf32>
    %c0_33 = arith.constant 0 : index
    %c0_34 = arith.constant 0 : index
    %45 = vector.load %arg10[%c0_33, %c0_34] : memref<48x128xf32, #tpu.memory_space<vmem>>, vector<48x128xf32>
    tpu.vector_store %arg10[%c0_33, %c0_34], %44 {strides = array<i32>} : memref<48x128xf32, #tpu.memory_space<vmem>>, vector<48x128xf32>,
    return
  }
  func.func @transform_0(%arg0: i32) -> (i32, i32) {
    %c0_i32 = arith.constant 0 : i32
    %c0_i32_0 = arith.constant 0 : i32
    return %arg0, %c0_i32 : i32, i32
  }
  func.func @transform_1(%arg0: i32) -> (i32, i32) {
    %c0_i32 = arith.constant 0 : i32
    %c0_i32_0 = arith.constant 0 : i32
    %c0_i32_1 = arith.constant 0 : i32
    return %c0_i32, %c0_i32_0 : i32, i32
  }
  func.func @transform_2(%arg0: i32) -> (i32, i32) {
    %c0_i32 = arith.constant 0 : i32
    %c0_i32_0 = arith.constant 0 : i32
    %c0_i32_1 = arith.constant 0 : i32
    return %c0_i32, %c0_i32_0 : i32, i32
  }
  func.func @transform_3(%arg0: i32) -> (i32, i32) {
    %c0_i32 = arith.constant 0 : i32
    %c0_i32_0 = arith.constant 0 : i32
    %c0_i32_1 = arith.constant 0 : i32
    return %c0_i32, %c0_i32_0 : i32, i32
  }
  func.func @transform_4(%arg0: i32) -> (i32, i32) {
    %c0_i32 = arith.constant 0 : i32
    %c0_i32_0 = arith.constant 0 : i32
    %c0_i32_1 = arith.constant 0 : i32
    return %c0_i32, %c0_i32_0 : i32, i32
  }
  func.func @transform_5(%arg0: i32) -> (i32, i32) {
    %c0_i32 = arith.constant 0 : i32
    %c0_i32_0 = arith.constant 0 : i32
    %c0_i32_1 = arith.constant 0 : i32
    return %c0_i32, %c0_i32_0 : i32, i32
  }
  func.func @transform_6(%arg0: i32) -> (i32, i32) {
    %c0_i32 = arith.constant 0 : i32
    %c0_i32_0 = arith.constant 0 : i32
    %c0_i32_1 = arith.constant 0 : i32
    return %c0_i32, %c0_i32_0 : i32, i32
  }
  func.func @transform_7(%arg0: i32) -> (i32, i32) {
    %c0_i32 = arith.constant 0 : i32
    %c0_i32_0 = arith.constant 0 : i32
    %c0_i32_1 = arith.constant 0 : i32
    return %c0_i32, %c0_i32_0 : i32, i32
  }
  func.func @transform_8(%arg0: i32) -> (i32, i32) {
    %c0_i32 = arith.constant 0 : i32
    %c0_i32_0 = arith.constant 0 : i32
    %c0_i32_1 = arith.constant 0 : i32
    return %c0_i32, %c0_i32_0 : i32, i32
  }
  func.func @transform_9(%arg0: i32) -> (i32, i32) {
    %c0_i32 = arith.constant 0 : i32
    %c0_i32_0 = arith.constant 0 : i32
    return %arg0, %c0_i32 : i32, i32
  }
  func.func @transform_10(%arg0: i32) -> (i32, i32) {
    %c0_i32 = arith.constant 0 : i32
    %c0_i32_0 = arith.constant 0 : i32
    return %arg0, %c0_i32 : i32, i32
  }
  func.func @transform_11(%arg0: i32) -> (i32, i32) {
    %c0_i32 = arith.constant 0 : i32
    %c0_i32_0 = arith.constant 0 : i32
    return %arg0, %c0_i32 : i32, i32
  }
  func.func @transform_12(%arg0: i32) -> (i32, i32) {
    %c0_i32 = arith.constant 0 : i32
    %c0_i32_0 = arith.constant 0 : i32
    return %arg0, %c0_i32 : i32, i32
  }
  func.func @transform_13(%arg0: i32) -> (i32, i32) {
    %c0_i32 = arith.constant 0 : i32
    %c0_i32_0 = arith.constant 0 : i32
    return %arg0, %c0_i32 : i32, i32
  }
}

</mosaic_0001>

<llo_original>
// kernel: tpu_custom_call.1
$region0: #{tpu_custom_call.1}
  #allocation0 [shape = 'u32[]', space=smem, size = 0x4, offset = 0x4, fixed_abs, tag = 'smem constant byte address 0x4 - core index']
  #allocation1 [shape = 'u32[72,128]{1,0:T(1,128)}', space=vmem, size = 0x9000, scoped, tag = 'internal scratch']
  %s0 = inlined_call_operand.hbm [shape: f32[48,256], index: 0, kind: input, shape index: {}]
  %s1 = inlined_call_operand.hbm [shape: bf16[256,256], index: 1, kind: input, shape index: {}]
  %s2 = inlined_call_operand.hbm [shape: f32[1,256], index: 2, kind: input, shape index: {}]
  %s3 = inlined_call_operand.hbm [shape: bf16[256,256], index: 3, kind: input, shape index: {}]
  %s4 = inlined_call_operand.vmem [shape: f32[1,256], index: 4, kind: input, shape index: {}]
  %s5 = inlined_call_operand.hbm [shape: bf16[256,256], index: 5, kind: input, shape index: {}]
  %s6 = inlined_call_operand.vmem [shape: f32[1,256], index: 6, kind: input, shape index: {}]
  %s7 = inlined_call_operand.hbm [shape: bf16[256,128], index: 7, kind: input, shape index: {}]
  %s8 = inlined_call_operand.vmem [shape: f32[1,128], index: 8, kind: input, shape index: {}]
  %s9 = inlined_call_operand.hbm [shape: f32[48,128], index: 9, kind: output, shape index: {0}]
  %s10 = inlined_call_operand.hbm [shape: f32[48,256], index: 10, kind: output, shape index: {1}]
  %s11 = inlined_call_operand.hbm [shape: f32[48,256], index: 11, kind: output, shape index: {2}]
  %s12 = inlined_call_operand.hbm [shape: f32[48,256], index: 12, kind: output, shape index: {3}]
  %s13 = inlined_call_operand.hbm [shape: f32[48,128], index: 13, kind: output, shape index: {4}]
  %14 = xla_tuple %s9, %s10, %s11, %s12, %s13
  %s15 = sld [smem:[#allocation0]]
  $region102: #{tpu_custom_call.1} parent=0
    _
  %s17 = ssub.s32 1, %s15
  %s18 = scalar_select 0, %s17, %s15
  $region1: #{tpu_custom_call.1} parent=0
    #allocation2 [shape = 'u8[49152]{0}', space=vmem, size = 0xc000, scoped, tag = 'input window, operand 0, single buffered']
    #allocation3 [shape = 's32[1]{0}', space=sflag, size = 0x4, scoped, tag = 'scoped memory for tpu_custom_call.1']
    #allocation4 [shape = 's32[1]{0}', space=sflag, size = 0x4, scoped, tag = 'scoped memory for tpu_custom_call.1']
    #allocation5 [shape = 'u8[131072]{0}', space=vmem, size = 0x20000, scoped, tag = 'input window, operand 1, single buffered']
    #allocation6 [shape = 's32[1]{0}', space=sflag, size = 0x4, scoped, tag = 'scoped memory for tpu_custom_call.1']
    #allocation7 [shape = 'u8[1024]{0}', space=vmem, size = 0x400, scoped, tag = 'input window, operand 2, single buffered']
    #allocation8 [shape = 'u8[131072]{0}', space=vmem, size = 0x20000, scoped, tag = 'input window, operand 3, single buffered']
    #allocation9 [shape = 's32[1]{0}', space=sflag, size = 0x4, scoped, tag = 'scoped memory for tpu_custom_call.1']
    #allocation10 [shape = 'u8[131072]{0}', space=vmem, size = 0x20000, scoped, tag = 'input window, operand 5, single buffered']
    #allocation11 [shape = 'u8[65536]{0}', space=vmem, size = 0x10000, scoped, tag = 'input window, operand 7, single buffered']
    #allocation12 [shape = 's32[1]{0}', space=sflag, size = 0x4, scoped, tag = 'scoped memory for tpu_custom_call.1']
    #allocation13 [shape = 'u8[24576]{0}', space=vmem, size = 0x6000, scoped, tag = 'output window, operand 0, single buffered']
    #allocation14 [shape = 'u8[49152]{0}', space=vmem, size = 0xc000, scoped, tag = 'output window, operand 1, single buffered']
    #allocation15 [shape = 's32[1]{0}', space=sflag, size = 0x4, scoped, tag = 'scoped memory for tpu_custom_call.1']
    #allocation16 [shape = 'u8[49152]{0}', space=vmem, size = 0xc000, scoped, tag = 'output window, operand 2, single buffered']
    #allocation17 [shape = 'u8[49152]{0}', space=vmem, size = 0xc000, scoped, tag = 'output window, operand 3, single buffered']
    #allocation18 [shape = 's32[1]{0}', space=sflag, size = 0x4, scoped, tag = 'scoped memory for tpu_custom_call.1']
    #allocation19 [shape = 'u8[24576]{0}', space=vmem, size = 0x6000, scoped, tag = 'output window, operand 4, single buffered']
    %19 = vsyncpa [#allocation3], 0
    %20 = vsyncpa [#allocation6], 0
    %21 = vsyncpa [#allocation9], 0
    %22 = vsyncpa [#allocation12], 0
    %23 = vsyncpa [#allocation4], 0
    %24 = vsyncpa [#allocation15], 0
    %25 = vsyncpa [#allocation18], 0
    // Predicated region
    $region2: #{tpu_custom_call.1} parent=1 // pred_check
      _
    $region3: #{tpu_custom_call.1} parent=1 // pred_check_branch
      %27 = sbr.rel (0) target = $region5
    $region4: #{tpu_custom_call.1} parent=1 // pred_region
      %29 = vsyncadd [#allocation3], 0
      %s30 = sshll.u32 %s0, 4
      %s31 = int_to_ptr.hbm [resolvable:$true] %s30
      %s32 = sshll.u32 [#allocation2], 4
      %s33 = int_to_ptr.vmem [resolvable:$true] %s32
      %38 = dma.hbm_to_vmem [thread:$0]  %s31, 1536, %s33, [#allocation3], 256, 256, 16
    $region5: #{tpu_custom_call.1} parent=1 // pred_fallthru
      _
    // Predicated region
    $region6: #{tpu_custom_call.1} parent=1 // pred_check
      _
    $region7: #{tpu_custom_call.1} parent=1 // pred_check_branch
      %40 = sbr.rel (0) target = $region9
    $region8: #{tpu_custom_call.1} parent=1 // pred_region
      %42 = vsyncadd [#allocation6], 0
      %s43 = sshll.u32 %s1, 4
      %s44 = int_to_ptr.hbm [resolvable:$true] %s43
      %s45 = sshll.u32 [#allocation5], 4
      %s46 = int_to_ptr.vmem [resolvable:$true] %s45
      %51 = dma.hbm_to_vmem [thread:$0]  %s44, 4096, %s46, [#allocation6], 128, 128, 8
    $region9: #{tpu_custom_call.1} parent=1 // pred_fallthru
      _
    // Predicated region
    $region10: #{tpu_custom_call.1} parent=1 // pred_check
      _
    $region11: #{tpu_custom_call.1} parent=1 // pred_check_branch
      %53 = sbr.rel (0) target = $region13
    $region12: #{tpu_custom_call.1} parent=1 // pred_region
      %55 = vsyncadd [#allocation6], 0
      %s57 = sshll.u32 %s2, 4
      %s58 = int_to_ptr.hbm [resolvable:$true] %s57
      %s59 = sshll.u32 [#allocation7], 4
      %s60 = int_to_ptr.vmem [resolvable:$true] %s59
      %62 = dma.hbm_to_vmem [thread:$0]  %s58, 32, %s60, [#allocation6]
    $region13: #{tpu_custom_call.1} parent=1 // pred_fallthru
      _
    // Predicated region
    $region14: #{tpu_custom_call.1} parent=1 // pred_check
      _
    $region15: #{tpu_custom_call.1} parent=1 // pred_check_branch
      %64 = sbr.rel (0) target = $region17
    $region16: #{tpu_custom_call.1} parent=1 // pred_region
      %66 = vsyncadd [#allocation9], 0
      %s67 = sshll.u32 %s3, 4
      %s68 = int_to_ptr.hbm [resolvable:$true] %s67
      %s69 = sshll.u32 [#allocation8], 4
      %s70 = int_to_ptr.vmem [resolvable:$true] %s69
      %75 = dma.hbm_to_vmem [thread:$0]  %s68, 4096, %s70, [#allocation9], 128, 128, 8
    $region17: #{tpu_custom_call.1} parent=1 // pred_fallthru
      _
    // Predicated region
    $region18: #{tpu_custom_call.1} parent=1 // pred_check
      _
    $region19: #{tpu_custom_call.1} parent=1 // pred_check_branch
      %77 = sbr.rel (0) target = $region21
    $region20: #{tpu_custom_call.1} parent=1 // pred_region
      _
    $region21: #{tpu_custom_call.1} parent=1 // pred_fallthru
      _
    // Predicated region
    $region22: #{tpu_custom_call.1} parent=1 // pred_check
      _
    $region23: #{tpu_custom_call.1} parent=1 // pred_check_branch
      %79 = sbr.rel (0) target = $region25
    $region24: #{tpu_custom_call.1} parent=1 // pred_region
      %81 = vsyncadd [#allocation9], 0
      %s82 = sshll.u32 %s5, 4
      %s83 = int_to_ptr.hbm [resolvable:$true] %s82
      %s84 = sshll.u32 [#allocation10], 4
      %s85 = int_to_ptr.vmem [resolvable:$true] %s84
      %90 = dma.hbm_to_vmem [thread:$0]  %s83, 4096, %s85, [#allocation9], 128, 128, 8
    $region25: #{tpu_custom_call.1} parent=1 // pred_fallthru
      _
    // Predicated region
    $region26: #{tpu_custom_call.1} parent=1 // pred_check
      _
    $region27: #{tpu_custom_call.1} parent=1 // pred_check_branch
      %92 = sbr.rel (0) target = $region29
    $region28: #{tpu_custom_call.1} parent=1 // pred_region
      _
    $region29: #{tpu_custom_call.1} parent=1 // pred_fallthru
      _
    // Predicated region
    $region30: #{tpu_custom_call.1} parent=1 // pred_check
      _
    $region31: #{tpu_custom_call.1} parent=1 // pred_check_branch
      %94 = sbr.rel (0) target = $region33
    $region32: #{tpu_custom_call.1} parent=1 // pred_region
      %96 = vsyncadd [#allocation12], 0
      %s97 = sshll.u32 %s7, 4
      %s98 = int_to_ptr.hbm [resolvable:$true] %s97
      %s99 = sshll.u32 [#allocation11], 4
      %s100 = int_to_ptr.vmem [resolvable:$true] %s99
      %105 = dma.hbm_to_vmem [thread:$0]  %s98, 2048, %s100, [#allocation12], 64, 64, 4
    $region33: #{tpu_custom_call.1} parent=1 // pred_fallthru
      _
    // Predicated region
    $region34: #{tpu_custom_call.1} parent=1 // pred_check
      _
    $region35: #{tpu_custom_call.1} parent=1 // pred_check_branch
      %107 = sbr.rel (0) target = $region37
    $region36: #{tpu_custom_call.1} parent=1 // pred_region
      _
    $region37: #{tpu_custom_call.1} parent=1 // pred_fallthru
      _
    // Predicated region
    $region38: #{tpu_custom_call.1} parent=1 // pred_check
      _
    $region39: #{tpu_custom_call.1} parent=1 // pred_check_branch
      %109 = sbr.rel (0) target = $region41
    $region40: #{tpu_custom_call.1} parent=1 // pred_region
      %111 = dma.done [#allocation3], 1536
    $region41: #{tpu_custom_call.1} parent=1 // pred_fallthru
      _
    // Predicated region
    $region42: #{tpu_custom_call.1} parent=1 // pred_check
      _
    $region43: #{tpu_custom_call.1} parent=1 // pred_check_branch
      %113 = sbr.rel (0) target = $region45
    $region44: #{tpu_custom_call.1} parent=1 // pred_region
      %115 = dma.done [#allocation6], 4096
    $region45: #{tpu_custom_call.1} parent=1 // pred_fallthru
      _
    // Predicated region
    $region46: #{tpu_custom_call.1} parent=1 // pred_check
      _
    $region47: #{tpu_custom_call.1} parent=1 // pred_check_branch
      %117 = sbr.rel (0) target = $region49
    $region48: #{tpu_custom_call.1} parent=1 // pred_region
      %119 = dma.done [#allocation6], 32
    $region49: #{tpu_custom_call.1} parent=1 // pred_fallthru
      _
    // Predicated region
    $region50: #{tpu_custom_call.1} parent=1 // pred_check
      _
    $region51: #{tpu_custom_call.1} parent=1 // pred_check_branch
      %121 = sbr.rel (0) target = $region53
    $region52: #{tpu_custom_call.1} parent=1 // pred_region
      %123 = dma.done [#allocation9], 4096
    $region53: #{tpu_custom_call.1} parent=1 // pred_fallthru
      _
    // Predicated region
    $region54: #{tpu_custom_call.1} parent=1 // pred_check
      _
    $region55: #{tpu_custom_call.1} parent=1 // pred_check_branch
      %125 = sbr.rel (0) target = $region57
    $region56: #{tpu_custom_call.1} parent=1 // pred_region
      %127 = dma.done [#allocation9], 4096
    $region57: #{tpu_custom_call.1} parent=1 // pred_fallthru
      _
    // Predicated region
    $region58: #{tpu_custom_call.1} parent=1 // pred_check
      _
    $region59: #{tpu_custom_call.1} parent=1 // pred_check_branch
      %129 = sbr.rel (0) target = $region61
    $region60: #{tpu_custom_call.1} parent=1 // pred_region
      %131 = dma.done [#allocation12], 2048
    $region61: #{tpu_custom_call.1} parent=1 // pred_fallthru
      _
    %v132 = vld [vmem:[#allocation2] sm:$0xff]
    %v133 = vld [vmem:[#allocation2 + $0x8] sm:$0xff]
    %v134 = vld [vmem:[#allocation2 + $0x10] sm:$0xff]
    %v135 = vld [vmem:[#allocation2 + $0x18] sm:$0xff]
    %v136 = vld [vmem:[#allocation2 + $0x20] sm:$0xff]
    %v137 = vld [vmem:[#allocation2 + $0x28] sm:$0xff]
    %v138 = vld [vmem:[#allocation2 + $0x30] sm:$0xff]
    %v139 = vld [vmem:[#allocation2 + $0x38] sm:$0xff]
    %v140 = vld [vmem:[#allocation2 + $0x40] sm:$0xff]
    %v141 = vld [vmem:[#allocation2 + $0x48] sm:$0xff]
    %v142 = vld [vmem:[#allocation2 + $0x50] sm:$0xff]
    %v143 = vld [vmem:[#allocation2 + $0x58] sm:$0xff]
    %v144 = vpack.c.bf16 %v134, %v132
    %v145 = vpack.c.bf16 %v135, %v133
    %v146 = vpack.c.bf16 %v138, %v136
    %v147 = vpack.c.bf16 %v139, %v137
    %v148 = vpack.c.bf16 %v142, %v140
    %v149 = vpack.c.bf16 %v143, %v141
    %v150 = vld [vmem:[#allocation5] sm:$0xff]
    %v151 = vld [vmem:[#allocation5 + $0x8] sm:$0xff]
    %v152 = vld [vmem:[#allocation5 + $0x10] sm:$0xff]
    %v153 = vld [vmem:[#allocation5 + $0x18] sm:$0xff]
    %v154 = vld [vmem:[#allocation5 + $0x20] sm:$0xff]
    %v155 = vld [vmem:[#allocation5 + $0x28] sm:$0xff]
    %v156 = vld [vmem:[#allocation5 + $0x30] sm:$0xff]
    %v157 = vld [vmem:[#allocation5 + $0x38] sm:$0xff]
    %v158 = vld [vmem:[#allocation5 + $0x40] sm:$0xff]
    %v159 = vld [vmem:[#allocation5 + $0x48] sm:$0xff]
    %v160 = vld [vmem:[#allocation5 + $0x50] sm:$0xff]
    %v161 = vld [vmem:[#allocation5 + $0x58] sm:$0xff]
    %v162 = vld [vmem:[#allocation5 + $0x60] sm:$0xff]
    %v163 = vld [vmem:[#allocation5 + $0x68] sm:$0xff]
    %v164 = vld [vmem:[#allocation5 + $0x70] sm:$0xff]
    %v165 = vld [vmem:[#allocation5 + $0x78] sm:$0xff]
    %v166 = vld [vmem:[#allocation5 + $0x80] sm:$0xff]
    %v167 = vld [vmem:[#allocation5 + $0x88] sm:$0xff]
    %v168 = vld [vmem:[#allocation5 + $0x90] sm:$0xff]
    %v169 = vld [vmem:[#allocation5 + $0x98] sm:$0xff]
    %v170 = vld [vmem:[#allocation5 + $0xa0] sm:$0xff]
    %v171 = vld [vmem:[#allocation5 + $0xa8] sm:$0xff]
    %v172 = vld [vmem:[#allocation5 + $0xb0] sm:$0xff]
    %v173 = vld [vmem:[#allocation5 + $0xb8] sm:$0xff]
    %v174 = vld [vmem:[#allocation5 + $0xc0] sm:$0xff]
    %v175 = vld [vmem:[#allocation5 + $0xc8] sm:$0xff]
    %v176 = vld [vmem:[#allocation5 + $0xd0] sm:$0xff]
    %v177 = vld [vmem:[#allocation5 + $0xd8] sm:$0xff]
    %v178 = vld [vmem:[#allocation5 + $0xe0] sm:$0xff]
    %v179 = vld [vmem:[#allocation5 + $0xe8] sm:$0xff]
    %v180 = vld [vmem:[#allocation5 + $0xf0] sm:$0xff]
    %v181 = vld [vmem:[#allocation5 + $0xf8] sm:$0xff]
    %v182 = vld [vmem:[#allocation7] sm:$0x3]
    %v184 = vperm.slane %v182, 0
    %v185 = vperm.slane %v182, 1
    %v220 = vunpack.c.l.b16 %v150
    %v221 = vunpack.c.h.b16 %v150
    %v222 = vunpack.c.l.b16 %v151
    %v223 = vunpack.c.h.b16 %v151
    %v224 = vunpack.c.l.b16 %v152
    %v225 = vunpack.c.h.b16 %v152
    %v226 = vunpack.c.l.b16 %v153
    %v227 = vunpack.c.h.b16 %v153
    %v228 = vunpack.c.l.b16 %v154
    %v229 = vunpack.c.h.b16 %v154
    %v230 = vunpack.c.l.b16 %v155
    %v231 = vunpack.c.h.b16 %v155
    %v232 = vunpack.c.l.b16 %v156
    %v233 = vunpack.c.h.b16 %v156
    %v234 = vunpack.c.l.b16 %v157
    %v235 = vunpack.c.h.b16 %v157
    %v236 = vunpack.c.l.b16 %v158
    %v237 = vunpack.c.h.b16 %v158
    %v238 = vunpack.c.l.b16 %v159
    %v239 = vunpack.c.h.b16 %v159
    %v240 = vunpack.c.l.b16 %v160
    %v241 = vunpack.c.h.b16 %v160
    %v242 = vunpack.c.l.b16 %v161
    %v243 = vunpack.c.h.b16 %v161
    %v244 = vunpack.c.l.b16 %v162
    %v245 = vunpack.c.h.b16 %v162
    %v246 = vunpack.c.l.b16 %v163
    %v247 = vunpack.c.h.b16 %v163
    %v248 = vunpack.c.l.b16 %v164
    %v249 = vunpack.c.h.b16 %v164
    %v250 = vunpack.c.l.b16 %v165
    %v251 = vunpack.c.h.b16 %v165
    %v252 = vunpack.c.l.b16 %v166
    %v253 = vunpack.c.h.b16 %v166
    %v254 = vunpack.c.l.b16 %v167
    %v255 = vunpack.c.h.b16 %v167
    %v256 = vunpack.c.l.b16 %v168
    %v257 = vunpack.c.h.b16 %v168
    %v258 = vunpack.c.l.b16 %v169
    %v259 = vunpack.c.h.b16 %v169
    %v260 = vunpack.c.l.b16 %v170
    %v261 = vunpack.c.h.b16 %v170
    %v262 = vunpack.c.l.b16 %v171
    %v263 = vunpack.c.h.b16 %v171
    %v264 = vunpack.c.l.b16 %v172
    %v265 = vunpack.c.h.b16 %v172
    %v266 = vunpack.c.l.b16 %v173
    %v267 = vunpack.c.h.b16 %v173
    %v268 = vunpack.c.l.b16 %v174
    %v269 = vunpack.c.h.b16 %v174
    %v270 = vunpack.c.l.b16 %v175
    %v271 = vunpack.c.h.b16 %v175
    %v272 = vunpack.c.l.b16 %v176
    %v273 = vunpack.c.h.b16 %v176
    %v274 = vunpack.c.l.b16 %v177
    %v275 = vunpack.c.h.b16 %v177
    %v276 = vunpack.c.l.b16 %v178
    %v277 = vunpack.c.h.b16 %v178
    %v278 = vunpack.c.l.b16 %v179
    %v279 = vunpack.c.h.b16 %v179
    %v280 = vunpack.c.l.b16 %v180
    %v281 = vunpack.c.h.b16 %v180
    %v282 = vunpack.c.l.b16 %v181
    %v283 = vunpack.c.h.b16 %v181
    %v284 = vpack.c.b16 %v222, %v220
    %v285 = vpack.c.b16 %v223, %v221
    %v286 = vpack.c.b16 %v226, %v224
    %v287 = vpack.c.b16 %v227, %v225
    %v288 = vpack.c.b16 %v230, %v228
    %v289 = vpack.c.b16 %v231, %v229
    %v290 = vpack.c.b16 %v234, %v232
    %v291 = vpack.c.b16 %v235, %v233
    %v292 = vpack.c.b16 %v238, %v236
    %v293 = vpack.c.b16 %v239, %v237
    %v294 = vpack.c.b16 %v242, %v240
    %v295 = vpack.c.b16 %v243, %v241
    %v296 = vpack.c.b16 %v246, %v244
    %v297 = vpack.c.b16 %v247, %v245
    %v298 = vpack.c.b16 %v250, %v248
    %v299 = vpack.c.b16 %v251, %v249
    %v300 = vpack.c.b16 %v254, %v252
    %v301 = vpack.c.b16 %v255, %v253
    %v302 = vpack.c.b16 %v258, %v256
    %v303 = vpack.c.b16 %v259, %v257
    %v304 = vpack.c.b16 %v262, %v260
    %v305 = vpack.c.b16 %v263, %v261
    %v306 = vpack.c.b16 %v266, %v264
    %v307 = vpack.c.b16 %v267, %v265
    %v308 = vpack.c.b16 %v270, %v268
    %v309 = vpack.c.b16 %v271, %v269
    %v310 = vpack.c.b16 %v274, %v272
    %v311 = vpack.c.b16 %v275, %v273
    %v312 = vpack.c.b16 %v278, %v276
    %v313 = vpack.c.b16 %v279, %v277
    %v314 = vpack.c.b16 %v282, %v280
    %v315 = vpack.c.b16 %v283, %v281
    %348 = vmatpush.bf16.msra.mxu0 %v298
    %349 = vmatpush.bf16.msra.mxu0 %v296
    %350 = vmatpush.bf16.msra.mxu0 %v294
    %351 = vmatpush.bf16.msra.mxu0 %v292
    %352 = vmatpush.bf16.msra.mxu0 %v290
    %353 = vmatpush.bf16.msra.mxu0 %v288
    %354 = vmatpush.bf16.msra.mxu0 %v286
    %355 = vmatpush.bf16.msra.mxu0 %v284
    %356 = vmatmul.bf16.gmra.mxu0 %v144
    %v357 = vpop.f32.mrf.mxu0
    %v358 = vadd.f32 %v184, %v357
    %v359 = vpop.f32.mrf.mxu0
    %v360 = vadd.f32 %v184, %v359
    %361 = vmatmul.bf16.gmra.mxu0 %v146
    %v362 = vpop.f32.mrf.mxu0
    %v363 = vadd.f32 %v184, %v362
    %v364 = vpop.f32.mrf.mxu0
    %v365 = vadd.f32 %v184, %v364
    %366 = vmatmul.bf16.gmra.mxu0 %v148
    %v367 = vpop.f32.mrf.mxu0
    %v368 = vadd.f32 %v184, %v367
    %v369 = vpop.f32.mrf.mxu0
    %v370 = vadd.f32 %v184, %v369
    %371 = vdwg.mxu0
    %372 = vmatpush.bf16.msra.mxu0 %v314
    %373 = vmatpush.bf16.msra.mxu0 %v312
    %374 = vmatpush.bf16.msra.mxu0 %v310
    %375 = vmatpush.bf16.msra.mxu0 %v308
    %376 = vmatpush.bf16.msra.mxu0 %v306
    %377 = vmatpush.bf16.msra.mxu0 %v304
    %378 = vmatpush.bf16.msra.mxu0 %v302
    %379 = vmatpush.bf16.msra.mxu0 %v300
    %380 = vmatmul.bf16.gmra.mxu0 %v145
    %v381 = vpop.f32.mrf.mxu0
    %v382 = vadd.f32 %v358, %v381
    %v383 = vpop.f32.mrf.mxu0
    %v384 = vadd.f32 %v360, %v383
    %385 = vmatmul.bf16.gmra.mxu0 %v147
    %v386 = vpop.f32.mrf.mxu0
    %v387 = vadd.f32 %v363, %v386
    %v388 = vpop.f32.mrf.mxu0
    %v389 = vadd.f32 %v365, %v388
    %390 = vmatmul.bf16.gmra.mxu0 %v149
    %v391 = vpop.f32.mrf.mxu0
    %v392 = vadd.f32 %v368, %v391
    %v393 = vpop.f32.mrf.mxu0
    %v394 = vadd.f32 %v370, %v393
    %395 = vdwg.mxu0
    %396 = vmatpush.bf16.msra.mxu0 %v299
    %397 = vmatpush.bf16.msra.mxu0 %v297
    %398 = vmatpush.bf16.msra.mxu0 %v295
    %399 = vmatpush.bf16.msra.mxu0 %v293
    %400 = vmatpush.bf16.msra.mxu0 %v291
    %401 = vmatpush.bf16.msra.mxu0 %v289
    %402 = vmatpush.bf16.msra.mxu0 %v287
    %403 = vmatpush.bf16.msra.mxu0 %v285
    %404 = vmatmul.bf16.gmra.mxu0 %v144
    %v405 = vpop.f32.mrf.mxu0
    %v406 = vadd.f32 %v185, %v405
    %v407 = vpop.f32.mrf.mxu0
    %v408 = vadd.f32 %v185, %v407
    %409 = vmatmul.bf16.gmra.mxu0 %v146
    %v410 = vpop.f32.mrf.mxu0
    %v411 = vadd.f32 %v185, %v410
    %v412 = vpop.f32.mrf.mxu0
    %v413 = vadd.f32 %v185, %v412
    %414 = vmatmul.bf16.gmra.mxu0 %v148
    %v415 = vpop.f32.mrf.mxu0
    %v416 = vadd.f32 %v185, %v415
    %v417 = vpop.f32.mrf.mxu0
    %v418 = vadd.f32 %v185, %v417
    %419 = vdwg.mxu0
    %420 = vmatpush.bf16.msra.mxu0 %v315
    %421 = vmatpush.bf16.msra.mxu0 %v313
    %422 = vmatpush.bf16.msra.mxu0 %v311
    %423 = vmatpush.bf16.msra.mxu0 %v309
    %424 = vmatpush.bf16.msra.mxu0 %v307
    %425 = vmatpush.bf16.msra.mxu0 %v305
    %426 = vmatpush.bf16.msra.mxu0 %v303
    %427 = vmatpush.bf16.msra.mxu0 %v301
    %428 = vmatmul.bf16.gmra.mxu0 %v145
    %v429 = vpop.f32.mrf.mxu0
    %v430 = vadd.f32 %v406, %v429
    %v431 = vpop.f32.mrf.mxu0
    %v432 = vadd.f32 %v408, %v431
    %433 = vmatmul.bf16.gmra.mxu0 %v147
    %v434 = vpop.f32.mrf.mxu0
    %v435 = vadd.f32 %v411, %v434
    %v436 = vpop.f32.mrf.mxu0
    %v437 = vadd.f32 %v413, %v436
    %438 = vmatmul.bf16.gmra.mxu0 %v149
    %v439 = vpop.f32.mrf.mxu0
    %v440 = vadd.f32 %v416, %v439
    %v441 = vpop.f32.mrf.mxu0
    %v442 = vadd.f32 %v418, %v441
    %443 = vdwg.mxu0
    %v444 = vmax.f32 %v382, 0.0
    %v445 = vmax.f32 %v430, 0.0
    %v446 = vmax.f32 %v384, 0.0
    %v447 = vmax.f32 %v432, 0.0
    %v448 = vmax.f32 %v387, 0.0
    %v449 = vmax.f32 %v435, 0.0
    %v450 = vmax.f32 %v389, 0.0
    %v451 = vmax.f32 %v437, 0.0
    %v452 = vmax.f32 %v392, 0.0
    %v453 = vmax.f32 %v440, 0.0
    %v454 = vmax.f32 %v394, 0.0
    %v455 = vmax.f32 %v442, 0.0
    %v456 = vpack.c.bf16 %v446, %v444
    %v457 = vpack.c.bf16 %v447, %v445
    %v458 = vpack.c.bf16 %v450, %v448
    %v459 = vpack.c.bf16 %v451, %v449
    %v460 = vpack.c.bf16 %v454, %v452
    %v461 = vpack.c.bf16 %v455, %v453
    %v462 = vld [vmem:[#allocation8] sm:$0xff]
    %v463 = vld [vmem:[#allocation8 + $0x8] sm:$0xff]
    %v464 = vld [vmem:[#allocation8 + $0x10] sm:$0xff]
    %v465 = vld [vmem:[#allocation8 + $0x18] sm:$0xff]
    %v466 = vld [vmem:[#allocation8 + $0x20] sm:$0xff]
    %v467 = vld [vmem:[#allocation8 + $0x28] sm:$0xff]
    %v468 = vld [vmem:[#allocation8 + $0x30] sm:$0xff]
    %v469 = vld [vmem:[#allocation8 + $0x38] sm:$0xff]
    %v470 = vld [vmem:[#allocation8 + $0x40] sm:$0xff]
    %v471 = vld [vmem:[#allocation8 + $0x48] sm:$0xff]
    %v472 = vld [vmem:[#allocation8 + $0x50] sm:$0xff]
    %v473 = vld [vmem:[#allocation8 + $0x58] sm:$0xff]
    %v474 = vld [vmem:[#allocation8 + $0x60] sm:$0xff]
    %v475 = vld [vmem:[#allocation8 + $0x68] sm:$0xff]
    %v476 = vld [vmem:[#allocation8 + $0x70] sm:$0xff]
    %v477 = vld [vmem:[#allocation8 + $0x78] sm:$0xff]
    %v478 = vld [vmem:[#allocation8 + $0x80] sm:$0xff]
    %v479 = vld [vmem:[#allocation8 + $0x88] sm:$0xff]
    %v480 = vld [vmem:[#allocation8 + $0x90] sm:$0xff]
    %v481 = vld [vmem:[#allocation8 + $0x98] sm:$0xff]
    %v482 = vld [vmem:[#allocation8 + $0xa0] sm:$0xff]
    %v483 = vld [vmem:[#allocation8 + $0xa8] sm:$0xff]
    %v484 = vld [vmem:[#allocation8 + $0xb0] sm:$0xff]
    %v485 = vld [vmem:[#allocation8 + $0xb8] sm:$0xff]
    %v486 = vld [vmem:[#allocation8 + $0xc0] sm:$0xff]
    %v487 = vld [vmem:[#allocation8 + $0xc8] sm:$0xff]
    %v488 = vld [vmem:[#allocation8 + $0xd0] sm:$0xff]
    %v489 = vld [vmem:[#allocation8 + $0xd8] sm:$0xff]
    %v490 = vld [vmem:[#allocation8 + $0xe0] sm:$0xff]
    %v491 = vld [vmem:[#allocation8 + $0xe8] sm:$0xff]
    %v492 = vld [vmem:[#allocation8 + $0xf0] sm:$0xff]
    %v493 = vld [vmem:[#allocation8 + $0xf8] sm:$0xff]
    %v494 = vld [vmem:[%s4] sm:$0x3]
    %v496 = vperm.slane %v494, 0
    %v497 = vperm.slane %v494, 1
    %v532 = vunpack.c.l.b16 %v462
    %v533 = vunpack.c.h.b16 %v462
    %v534 = vunpack.c.l.b16 %v463
    %v535 = vunpack.c.h.b16 %v463
    %v536 = vunpack.c.l.b16 %v464
    %v537 = vunpack.c.h.b16 %v464
    %v538 = vunpack.c.l.b16 %v465
    %v539 = vunpack.c.h.b16 %v465
    %v540 = vunpack.c.l.b16 %v466
    %v541 = vunpack.c.h.b16 %v466
    %v542 = vunpack.c.l.b16 %v467
    %v543 = vunpack.c.h.b16 %v467
    %v544 = vunpack.c.l.b16 %v468
    %v545 = vunpack.c.h.b16 %v468
    %v546 = vunpack.c.l.b16 %v469
    %v547 = vunpack.c.h.b16 %v469
    %v548 = vunpack.c.l.b16 %v470
    %v549 = vunpack.c.h.b16 %v470
    %v550 = vunpack.c.l.b16 %v471
    %v551 = vunpack.c.h.b16 %v471
    %v552 = vunpack.c.l.b16 %v472
    %v553 = vunpack.c.h.b16 %v472
    %v554 = vunpack.c.l.b16 %v473
    %v555 = vunpack.c.h.b16 %v473
    %v556 = vunpack.c.l.b16 %v474
    %v557 = vunpack.c.h.b16 %v474
    %v558 = vunpack.c.l.b16 %v475
    %v559 = vunpack.c.h.b16 %v475
    %v560 = vunpack.c.l.b16 %v476
    %v561 = vunpack.c.h.b16 %v476
    %v562 = vunpack.c.l.b16 %v477
    %v563 = vunpack.c.h.b16 %v477
    %v564 = vunpack.c.l.b16 %v478
    %v565 = vunpack.c.h.b16 %v478
    %v566 = vunpack.c.l.b16 %v479
    %v567 = vunpack.c.h.b16 %v479
    %v568 = vunpack.c.l.b16 %v480
    %v569 = vunpack.c.h.b16 %v480
    %v570 = vunpack.c.l.b16 %v481
    %v571 = vunpack.c.h.b16 %v481
    %v572 = vunpack.c.l.b16 %v482
    %v573 = vunpack.c.h.b16 %v482
    %v574 = vunpack.c.l.b16 %v483
    %v575 = vunpack.c.h.b16 %v483
    %v576 = vunpack.c.l.b16 %v484
    %v577 = vunpack.c.h.b16 %v484
    %v578 = vunpack.c.l.b16 %v485
    %v579 = vunpack.c.h.b16 %v485
    %v580 = vunpack.c.l.b16 %v486
    %v581 = vunpack.c.h.b16 %v486
    %v582 = vunpack.c.l.b16 %v487
    %v583 = vunpack.c.h.b16 %v487
    %v584 = vunpack.c.l.b16 %v488
    %v585 = vunpack.c.h.b16 %v488
    %v586 = vunpack.c.l.b16 %v489
    %v587 = vunpack.c.h.b16 %v489
    %v588 = vunpack.c.l.b16 %v490
    %v589 = vunpack.c.h.b16 %v490
    %v590 = vunpack.c.l.b16 %v491
    %v591 = vunpack.c.h.b16 %v491
    %v592 = vunpack.c.l.b16 %v492
    %v593 = vunpack.c.h.b16 %v492
    %v594 = vunpack.c.l.b16 %v493
    %v595 = vunpack.c.h.b16 %v493
    %v596 = vpack.c.b16 %v534, %v532
    %v597 = vpack.c.b16 %v535, %v533
    %v598 = vpack.c.b16 %v538, %v536
    %v599 = vpack.c.b16 %v539, %v537
    %v600 = vpack.c.b16 %v542, %v540
    %v601 = vpack.c.b16 %v543, %v541
    %v602 = vpack.c.b16 %v546, %v544
    %v603 = vpack.c.b16 %v547, %v545
    %v604 = vpack.c.b16 %v550, %v548
    %v605 = vpack.c.b16 %v551, %v549
    %v606 = vpack.c.b16 %v554, %v552
    %v607 = vpack.c.b16 %v555, %v553
    %v608 = vpack.c.b16 %v558, %v556
    %v609 = vpack.c.b16 %v559, %v557
    %v610 = vpack.c.b16 %v562, %v560
    %v611 = vpack.c.b16 %v563, %v561
    %v612 = vpack.c.b16 %v566, %v564
    %v613 = vpack.c.b16 %v567, %v565
    %v614 = vpack.c.b16 %v570, %v568
    %v615 = vpack.c.b16 %v571, %v569
    %v616 = vpack.c.b16 %v574, %v572
    %v617 = vpack.c.b16 %v575, %v573
    %v618 = vpack.c.b16 %v578, %v576
    %v619 = vpack.c.b16 %v579, %v577
    %v620 = vpack.c.b16 %v582, %v580
    %v621 = vpack.c.b16 %v583, %v581
    %v622 = vpack.c.b16 %v586, %v584
    %v623 = vpack.c.b16 %v587, %v585
    %v624 = vpack.c.b16 %v590, %v588
    %v625 = vpack.c.b16 %v591, %v589
    %v626 = vpack.c.b16 %v594, %v592
    %v627 = vpack.c.b16 %v595, %v593
    %660 = vmatpush.bf16.msra.mxu0 %v610
    %661 = vmatpush.bf16.msra.mxu0 %v608
    %662 = vmatpush.bf16.msra.mxu0 %v606
    %663 = vmatpush.bf16.msra.mxu0 %v604
    %664 = vmatpush.bf16.msra.mxu0 %v602
    %665 = vmatpush.bf16.msra.mxu0 %v600
    %666 = vmatpush.bf16.msra.mxu0 %v598
    %667 = vmatpush.bf16.msra.mxu0 %v596
    %668 = vmatmul.bf16.gmra.mxu0 %v456
    %v669 = vpop.f32.mrf.mxu0
    %v670 = vadd.f32 %v496, %v669
    %v671 = vpop.f32.mrf.mxu0
    %v672 = vadd.f32 %v496, %v671
    %673 = vmatmul.bf16.gmra.mxu0 %v458
    %v674 = vpop.f32.mrf.mxu0
    %v675 = vadd.f32 %v496, %v674
    %v676 = vpop.f32.mrf.mxu0
    %v677 = vadd.f32 %v496, %v676
    %678 = vmatmul.bf16.gmra.mxu0 %v460
    %v679 = vpop.f32.mrf.mxu0
    %v680 = vadd.f32 %v496, %v679
    %v681 = vpop.f32.mrf.mxu0
    %v682 = vadd.f32 %v496, %v681
    %683 = vdwg.mxu0
    %684 = vmatpush.bf16.msra.mxu0 %v626
    %685 = vmatpush.bf16.msra.mxu0 %v624
    %686 = vmatpush.bf16.msra.mxu0 %v622
    %687 = vmatpush.bf16.msra.mxu0 %v620
    %688 = vmatpush.bf16.msra.mxu0 %v618
    %689 = vmatpush.bf16.msra.mxu0 %v616
    %690 = vmatpush.bf16.msra.mxu0 %v614
    %691 = vmatpush.bf16.msra.mxu0 %v612
    %692 = vmatmul.bf16.gmra.mxu0 %v457
    %v693 = vpop.f32.mrf.mxu0
    %v694 = vadd.f32 %v670, %v693
    %v695 = vpop.f32.mrf.mxu0
    %v696 = vadd.f32 %v672, %v695
    %697 = vmatmul.bf16.gmra.mxu0 %v459
    %v698 = vpop.f32.mrf.mxu0
    %v699 = vadd.f32 %v675, %v698
    %v700 = vpop.f32.mrf.mxu0
    %v701 = vadd.f32 %v677, %v700
    %702 = vmatmul.bf16.gmra.mxu0 %v461
    %v703 = vpop.f32.mrf.mxu0
    %v704 = vadd.f32 %v680, %v703
    %v705 = vpop.f32.mrf.mxu0
    %v706 = vadd.f32 %v682, %v705
    %707 = vdwg.mxu0
    %708 = vmatpush.bf16.msra.mxu0 %v611
    %709 = vmatpush.bf16.msra.mxu0 %v609
    %710 = vmatpush.bf16.msra.mxu0 %v607
    %711 = vmatpush.bf16.msra.mxu0 %v605
    %712 = vmatpush.bf16.msra.mxu0 %v603
    %713 = vmatpush.bf16.msra.mxu0 %v601
    %714 = vmatpush.bf16.msra.mxu0 %v599
    %715 = vmatpush.bf16.msra.mxu0 %v597
    %716 = vmatmul.bf16.gmra.mxu0 %v456
    %v717 = vpop.f32.mrf.mxu0
    %v718 = vadd.f32 %v497, %v717
    %v719 = vpop.f32.mrf.mxu0
    %v720 = vadd.f32 %v497, %v719
    %721 = vmatmul.bf16.gmra.mxu0 %v458
    %v722 = vpop.f32.mrf.mxu0
    %v723 = vadd.f32 %v497, %v722
    %v724 = vpop.f32.mrf.mxu0
    %v725 = vadd.f32 %v497, %v724
    %726 = vmatmul.bf16.gmra.mxu0 %v460
    %v727 = vpop.f32.mrf.mxu0
    %v728 = vadd.f32 %v497, %v727
    %v729 = vpop.f32.mrf.mxu0
    %v730 = vadd.f32 %v497, %v729
    %731 = vdwg.mxu0
    %732 = vmatpush.bf16.msra.mxu0 %v627
    %733 = vmatpush.bf16.msra.mxu0 %v625
    %734 = vmatpush.bf16.msra.mxu0 %v623
    %735 = vmatpush.bf16.msra.mxu0 %v621
    %736 = vmatpush.bf16.msra.mxu0 %v619
    %737 = vmatpush.bf16.msra.mxu0 %v617
    %738 = vmatpush.bf16.msra.mxu0 %v615
    %739 = vmatpush.bf16.msra.mxu0 %v613
    %740 = vmatmul.bf16.gmra.mxu0 %v457
    %v741 = vpop.f32.mrf.mxu0
    %v742 = vadd.f32 %v718, %v741
    %v743 = vpop.f32.mrf.mxu0
    %v744 = vadd.f32 %v720, %v743
    %745 = vmatmul.bf16.gmra.mxu0 %v459
    %v746 = vpop.f32.mrf.mxu0
    %v747 = vadd.f32 %v723, %v746
    %v748 = vpop.f32.mrf.mxu0
    %v749 = vadd.f32 %v725, %v748
    %750 = vmatmul.bf16.gmra.mxu0 %v461
    %v751 = vpop.f32.mrf.mxu0
    %v752 = vadd.f32 %v728, %v751
    %v753 = vpop.f32.mrf.mxu0
    %v754 = vadd.f32 %v730, %v753
    %755 = vdwg.mxu0
    %v756 = vmax.f32 %v694, 0.0
    %v757 = vmax.f32 %v742, 0.0
    %v758 = vmax.f32 %v696, 0.0
    %v759 = vmax.f32 %v744, 0.0
    %v760 = vmax.f32 %v699, 0.0
    %v761 = vmax.f32 %v747, 0.0
    %v762 = vmax.f32 %v701, 0.0
    %v763 = vmax.f32 %v749, 0.0
    %v764 = vmax.f32 %v704, 0.0
    %v765 = vmax.f32 %v752, 0.0
    %v766 = vmax.f32 %v706, 0.0
    %v767 = vmax.f32 %v754, 0.0
    %v768 = vpack.c.bf16 %v758, %v756
    %v769 = vpack.c.bf16 %v759, %v757
    %v770 = vpack.c.bf16 %v762, %v760
    %v771 = vpack.c.bf16 %v763, %v761
    %v772 = vpack.c.bf16 %v766, %v764
    %v773 = vpack.c.bf16 %v767, %v765
    %v774 = vld [vmem:[#allocation10] sm:$0xff]
    %v775 = vld [vmem:[#allocation10 + $0x8] sm:$0xff]
    %v776 = vld [vmem:[#allocation10 + $0x10] sm:$0xff]
    %v777 = vld [vmem:[#allocation10 + $0x18] sm:$0xff]
    %v778 = vld [vmem:[#allocation10 + $0x20] sm:$0xff]
    %v779 = vld [vmem:[#allocation10 + $0x28] sm:$0xff]
    %v780 = vld [vmem:[#allocation10 + $0x30] sm:$0xff]
    %v781 = vld [vmem:[#allocation10 + $0x38] sm:$0xff]
    %v782 = vld [vmem:[#allocation10 + $0x40] sm:$0xff]
    %v783 = vld [vmem:[#allocation10 + $0x48] sm:$0xff]
    %v784 = vld [vmem:[#allocation10 + $0x50] sm:$0xff]
    %v785 = vld [vmem:[#allocation10 + $0x58] sm:$0xff]
    %v786 = vld [vmem:[#allocation10 + $0x60] sm:$0xff]
    %v787 = vld [vmem:[#allocation10 + $0x68] sm:$0xff]
    %v788 = vld [vmem:[#allocation10 + $0x70] sm:$0xff]
    %v789 = vld [vmem:[#allocation10 + $0x78] sm:$0xff]
    %v790 = vld [vmem:[#allocation10 + $0x80] sm:$0xff]
    %v791 = vld [vmem:[#allocation10 + $0x88] sm:$0xff]
    %v792 = vld [vmem:[#allocation10 + $0x90] sm:$0xff]
    %v793 = vld [vmem:[#allocation10 + $0x98] sm:$0xff]
    %v794 = vld [vmem:[#allocation10 + $0xa0] sm:$0xff]
    %v795 = vld [vmem:[#allocation10 + $0xa8] sm:$0xff]
    %v796 = vld [vmem:[#allocation10 + $0xb0] sm:$0xff]
    %v797 = vld [vmem:[#allocation10 + $0xb8] sm:$0xff]
    %v798 = vld [vmem:[#allocation10 + $0xc0] sm:$0xff]
    %v799 = vld [vmem:[#allocation10 + $0xc8] sm:$0xff]
    %v800 = vld [vmem:[#allocation10 + $0xd0] sm:$0xff]
    %v801 = vld [vmem:[#allocation10 + $0xd8] sm:$0xff]
    %v802 = vld [vmem:[#allocation10 + $0xe0] sm:$0xff]
    %v803 = vld [vmem:[#allocation10 + $0xe8] sm:$0xff]
    %v804 = vld [vmem:[#allocation10 + $0xf0] sm:$0xff]
    %v805 = vld [vmem:[#allocation10 + $0xf8] sm:$0xff]
    %v806 = vld [vmem:[%s6] sm:$0x3]
    %v808 = vperm.slane %v806, 0
    %v809 = vperm.slane %v806, 1
    %v844 = vunpack.c.l.b16 %v774
    %v845 = vunpack.c.h.b16 %v774
    %v846 = vunpack.c.l.b16 %v775
    %v847 = vunpack.c.h.b16 %v775
    %v848 = vunpack.c.l.b16 %v776
    %v849 = vunpack.c.h.b16 %v776
    %v850 = vunpack.c.l.b16 %v777
    %v851 = vunpack.c.h.b16 %v777
    %v852 = vunpack.c.l.b16 %v778
    %v853 = vunpack.c.h.b16 %v778
    %v854 = vunpack.c.l.b16 %v779
    %v855 = vunpack.c.h.b16 %v779
    %v856 = vunpack.c.l.b16 %v780
    %v857 = vunpack.c.h.b16 %v780
    %v858 = vunpack.c.l.b16 %v781
    %v859 = vunpack.c.h.b16 %v781
    %v860 = vunpack.c.l.b16 %v782
    %v861 = vunpack.c.h.b16 %v782
    %v862 = vunpack.c.l.b16 %v783
    %v863 = vunpack.c.h.b16 %v783
    %v864 = vunpack.c.l.b16 %v784
    %v865 = vunpack.c.h.b16 %v784
    %v866 = vunpack.c.l.b16 %v785
    %v867 = vunpack.c.h.b16 %v785
    %v868 = vunpack.c.l.b16 %v786
    %v869 = vunpack.c.h.b16 %v786
    %v870 = vunpack.c.l.b16 %v787
    %v871 = vunpack.c.h.b16 %v787
    %v872 = vunpack.c.l.b16 %v788
    %v873 = vunpack.c.h.b16 %v788
    %v874 = vunpack.c.l.b16 %v789
    %v875 = vunpack.c.h.b16 %v789
    %v876 = vunpack.c.l.b16 %v790
    %v877 = vunpack.c.h.b16 %v790
    %v878 = vunpack.c.l.b16 %v791
    %v879 = vunpack.c.h.b16 %v791
    %v880 = vunpack.c.l.b16 %v792
    %v881 = vunpack.c.h.b16 %v792
    %v882 = vunpack.c.l.b16 %v793
    %v883 = vunpack.c.h.b16 %v793
    %v884 = vunpack.c.l.b16 %v794
    %v885 = vunpack.c.h.b16 %v794
    %v886 = vunpack.c.l.b16 %v795
    %v887 = vunpack.c.h.b16 %v795
    %v888 = vunpack.c.l.b16 %v796
    %v889 = vunpack.c.h.b16 %v796
    %v890 = vunpack.c.l.b16 %v797
    %v891 = vunpack.c.h.b16 %v797
    %v892 = vunpack.c.l.b16 %v798
    %v893 = vunpack.c.h.b16 %v798
    %v894 = vunpack.c.l.b16 %v799
    %v895 = vunpack.c.h.b16 %v799
    %v896 = vunpack.c.l.b16 %v800
    %v897 = vunpack.c.h.b16 %v800
    %v898 = vunpack.c.l.b16 %v801
    %v899 = vunpack.c.h.b16 %v801
    %v900 = vunpack.c.l.b16 %v802
    %v901 = vunpack.c.h.b16 %v802
    %v902 = vunpack.c.l.b16 %v803
    %v903 = vunpack.c.h.b16 %v803
    %v904 = vunpack.c.l.b16 %v804
    %v905 = vunpack.c.h.b16 %v804
    %v906 = vunpack.c.l.b16 %v805
    %v907 = vunpack.c.h.b16 %v805
    %v908 = vpack.c.b16 %v846, %v844
    %v909 = vpack.c.b16 %v847, %v845
    %v910 = vpack.c.b16 %v850, %v848
    %v911 = vpack.c.b16 %v851, %v849
    %v912 = vpack.c.b16 %v854, %v852
    %v913 = vpack.c.b16 %v855, %v853
    %v914 = vpack.c.b16 %v858, %v856
    %v915 = vpack.c.b16 %v859, %v857
    %v916 = vpack.c.b16 %v862, %v860
    %v917 = vpack.c.b16 %v863, %v861
    %v918 = vpack.c.b16 %v866, %v864
    %v919 = vpack.c.b16 %v867, %v865
    %v920 = vpack.c.b16 %v870, %v868
    %v921 = vpack.c.b16 %v871, %v869
    %v922 = vpack.c.b16 %v874, %v872
    %v923 = vpack.c.b16 %v875, %v873
    %v924 = vpack.c.b16 %v878, %v876
    %v925 = vpack.c.b16 %v879, %v877
    %v926 = vpack.c.b16 %v882, %v880
    %v927 = vpack.c.b16 %v883, %v881
    %v928 = vpack.c.b16 %v886, %v884
    %v929 = vpack.c.b16 %v887, %v885
    %v930 = vpack.c.b16 %v890, %v888
    %v931 = vpack.c.b16 %v891, %v889
    %v932 = vpack.c.b16 %v894, %v892
    %v933 = vpack.c.b16 %v895, %v893
    %v934 = vpack.c.b16 %v898, %v896
    %v935 = vpack.c.b16 %v899, %v897
    %v936 = vpack.c.b16 %v902, %v900
    %v937 = vpack.c.b16 %v903, %v901
    %v938 = vpack.c.b16 %v906, %v904
    %v939 = vpack.c.b16 %v907, %v905
    %972 = vmatpush.bf16.msra.mxu0 %v922
    %973 = vmatpush.bf16.msra.mxu0 %v920
    %974 = vmatpush.bf16.msra.mxu0 %v918
    %975 = vmatpush.bf16.msra.mxu0 %v916
    %976 = vmatpush.bf16.msra.mxu0 %v914
    %977 = vmatpush.bf16.msra.mxu0 %v912
    %978 = vmatpush.bf16.msra.mxu0 %v910
    %979 = vmatpush.bf16.msra.mxu0 %v908
    %980 = vmatmul.bf16.gmra.mxu0 %v768
    %v981 = vpop.f32.mrf.mxu0
    %v982 = vadd.f32 %v808, %v981
    %v983 = vpop.f32.mrf.mxu0
    %v984 = vadd.f32 %v808, %v983
    %985 = vmatmul.bf16.gmra.mxu0 %v770
    %v986 = vpop.f32.mrf.mxu0
    %v987 = vadd.f32 %v808, %v986
    %v988 = vpop.f32.mrf.mxu0
    %v989 = vadd.f32 %v808, %v988
    %990 = vmatmul.bf16.gmra.mxu0 %v772
    %v991 = vpop.f32.mrf.mxu0
    %v992 = vadd.f32 %v808, %v991
    %v993 = vpop.f32.mrf.mxu0
    %v994 = vadd.f32 %v808, %v993
    %995 = vdwg.mxu0
    %996 = vmatpush.bf16.msra.mxu0 %v938
    %997 = vmatpush.bf16.msra.mxu0 %v936
    %998 = vmatpush.bf16.msra.mxu0 %v934
    %999 = vmatpush.bf16.msra.mxu0 %v932
    %1000 = vmatpush.bf16.msra.mxu0 %v930
    %1001 = vmatpush.bf16.msra.mxu0 %v928
    %1002 = vmatpush.bf16.msra.mxu0 %v926
    %1003 = vmatpush.bf16.msra.mxu0 %v924
    %1004 = vmatmul.bf16.gmra.mxu0 %v769
    %v1005 = vpop.f32.mrf.mxu0
    %v1006 = vadd.f32 %v982, %v1005
    %v1007 = vpop.f32.mrf.mxu0
    %v1008 = vadd.f32 %v984, %v1007
    %1009 = vmatmul.bf16.gmra.mxu0 %v771
    %v1010 = vpop.f32.mrf.mxu0
    %v1011 = vadd.f32 %v987, %v1010
    %v1012 = vpop.f32.mrf.mxu0
    %v1013 = vadd.f32 %v989, %v1012
    %1014 = vmatmul.bf16.gmra.mxu0 %v773
    %v1015 = vpop.f32.mrf.mxu0
    %v1016 = vadd.f32 %v992, %v1015
    %v1017 = vpop.f32.mrf.mxu0
    %v1018 = vadd.f32 %v994, %v1017
    %1019 = vdwg.mxu0
    %1020 = vmatpush.bf16.msra.mxu0 %v923
    %1021 = vmatpush.bf16.msra.mxu0 %v921
    %1022 = vmatpush.bf16.msra.mxu0 %v919
    %1023 = vmatpush.bf16.msra.mxu0 %v917
    %1024 = vmatpush.bf16.msra.mxu0 %v915
    %1025 = vmatpush.bf16.msra.mxu0 %v913
    %1026 = vmatpush.bf16.msra.mxu0 %v911
    %1027 = vmatpush.bf16.msra.mxu0 %v909
    %1028 = vmatmul.bf16.gmra.mxu0 %v768
    %v1029 = vpop.f32.mrf.mxu0
    %v1030 = vadd.f32 %v809, %v1029
    %v1031 = vpop.f32.mrf.mxu0
    %v1032 = vadd.f32 %v809, %v1031
    %1033 = vmatmul.bf16.gmra.mxu0 %v770
    %v1034 = vpop.f32.mrf.mxu0
    %v1035 = vadd.f32 %v809, %v1034
    %v1036 = vpop.f32.mrf.mxu0
    %v1037 = vadd.f32 %v809, %v1036
    %1038 = vmatmul.bf16.gmra.mxu0 %v772
    %v1039 = vpop.f32.mrf.mxu0
    %v1040 = vadd.f32 %v809, %v1039
    %v1041 = vpop.f32.mrf.mxu0
    %v1042 = vadd.f32 %v809, %v1041
    %1043 = vdwg.mxu0
    %1044 = vmatpush.bf16.msra.mxu0 %v939
    %1045 = vmatpush.bf16.msra.mxu0 %v937
    %1046 = vmatpush.bf16.msra.mxu0 %v935
    %1047 = vmatpush.bf16.msra.mxu0 %v933
    %1048 = vmatpush.bf16.msra.mxu0 %v931
    %1049 = vmatpush.bf16.msra.mxu0 %v929
    %1050 = vmatpush.bf16.msra.mxu0 %v927
    %1051 = vmatpush.bf16.msra.mxu0 %v925
    %1052 = vmatmul.bf16.gmra.mxu0 %v769
    %v1053 = vpop.f32.mrf.mxu0
    %v1054 = vadd.f32 %v1030, %v1053
    %v1055 = vpop.f32.mrf.mxu0
    %v1056 = vadd.f32 %v1032, %v1055
    %1057 = vmatmul.bf16.gmra.mxu0 %v771
    %v1058 = vpop.f32.mrf.mxu0
    %v1059 = vadd.f32 %v1035, %v1058
    %v1060 = vpop.f32.mrf.mxu0
    %v1061 = vadd.f32 %v1037, %v1060
    %1062 = vmatmul.bf16.gmra.mxu0 %v773
    %v1063 = vpop.f32.mrf.mxu0
    %v1064 = vadd.f32 %v1040, %v1063
    %v1065 = vpop.f32.mrf.mxu0
    %v1066 = vadd.f32 %v1042, %v1065
    %1067 = vdwg.mxu0
    %v1068 = vmax.f32 %v1006, 0.0
    %v1069 = vmax.f32 %v1054, 0.0
    %v1070 = vmax.f32 %v1008, 0.0
    %v1071 = vmax.f32 %v1056, 0.0
    %v1072 = vmax.f32 %v1011, 0.0
    %v1073 = vmax.f32 %v1059, 0.0
    %v1074 = vmax.f32 %v1013, 0.0
    %v1075 = vmax.f32 %v1061, 0.0
    %v1076 = vmax.f32 %v1016, 0.0
    %v1077 = vmax.f32 %v1064, 0.0
    %v1078 = vmax.f32 %v1018, 0.0
    %v1079 = vmax.f32 %v1066, 0.0
    %v1080 = vpack.c.bf16 %v1070, %v1068
    %v1081 = vpack.c.bf16 %v1071, %v1069
    %v1082 = vpack.c.bf16 %v1074, %v1072
    %v1083 = vpack.c.bf16 %v1075, %v1073
    %v1084 = vpack.c.bf16 %v1078, %v1076
    %v1085 = vpack.c.bf16 %v1079, %v1077
    %v1086 = vld [vmem:[#allocation11] sm:$0xf]
    %v1087 = vld [vmem:[#allocation11 + $0x4] sm:$0xf]
    %v1088 = vld [vmem:[#allocation11 + $0x8] sm:$0xf]
    %v1089 = vld [vmem:[#allocation11 + $0xc] sm:$0xf]
    %v1090 = vld [vmem:[#allocation11 + $0x10] sm:$0xf]
    %v1091 = vld [vmem:[#allocation11 + $0x14] sm:$0xf]
    %v1092 = vld [vmem:[#allocation11 + $0x18] sm:$0xf]
    %v1093 = vld [vmem:[#allocation11 + $0x1c] sm:$0xf]
    %v1094 = vld [vmem:[#allocation11 + $0x20] sm:$0xf]
    %v1095 = vld [vmem:[#allocation11 + $0x24] sm:$0xf]
    %v1096 = vld [vmem:[#allocation11 + $0x28] sm:$0xf]
    %v1097 = vld [vmem:[#allocation11 + $0x2c] sm:$0xf]
    %v1098 = vld [vmem:[#allocation11 + $0x30] sm:$0xf]
    %v1099 = vld [vmem:[#allocation11 + $0x34] sm:$0xf]
    %v1100 = vld [vmem:[#allocation11 + $0x38] sm:$0xf]
    %v1101 = vld [vmem:[#allocation11 + $0x3c] sm:$0xf]
    %v1102 = vld [vmem:[#allocation11 + $0x40] sm:$0xf]
    %v1103 = vld [vmem:[#allocation11 + $0x44] sm:$0xf]
    %v1104 = vld [vmem:[#allocation11 + $0x48] sm:$0xf]
    %v1105 = vld [vmem:[#allocation11 + $0x4c] sm:$0xf]
    %v1106 = vld [vmem:[#allocation11 + $0x50] sm:$0xf]
    %v1107 = vld [vmem:[#allocation11 + $0x54] sm:$0xf]
    %v1108 = vld [vmem:[#allocation11 + $0x58] sm:$0xf]
    %v1109 = vld [vmem:[#allocation11 + $0x5c] sm:$0xf]
    %v1110 = vld [vmem:[#allocation11 + $0x60] sm:$0xf]
    %v1111 = vld [vmem:[#allocation11 + $0x64] sm:$0xf]
    %v1112 = vld [vmem:[#allocation11 + $0x68] sm:$0xf]
    %v1113 = vld [vmem:[#allocation11 + $0x6c] sm:$0xf]
    %v1114 = vld [vmem:[#allocation11 + $0x70] sm:$0xf]
    %v1115 = vld [vmem:[#allocation11 + $0x74] sm:$0xf]
    %v1116 = vld [vmem:[#allocation11 + $0x78] sm:$0xf]
    %v1117 = vld [vmem:[#allocation11 + $0x7c] sm:$0xf]
    %v1118 = vld [vmem:[%s8] sm:$0x1]
    %v1120 = vperm.slane %v1118, 0
    %v1154 = vunpack.c.l.b16 %v1086
    %v1155 = vunpack.c.l.b16 %v1087
    %v1156 = vunpack.c.l.b16 %v1088
    %v1157 = vunpack.c.l.b16 %v1089
    %v1158 = vunpack.c.l.b16 %v1090
    %v1159 = vunpack.c.l.b16 %v1091
    %v1160 = vunpack.c.l.b16 %v1092
    %v1161 = vunpack.c.l.b16 %v1093
    %v1162 = vunpack.c.l.b16 %v1094
    %v1163 = vunpack.c.l.b16 %v1095
    %v1164 = vunpack.c.l.b16 %v1096
    %v1165 = vunpack.c.l.b16 %v1097
    %v1166 = vunpack.c.l.b16 %v1098
    %v1167 = vunpack.c.l.b16 %v1099
    %v1168 = vunpack.c.l.b16 %v1100
    %v1169 = vunpack.c.l.b16 %v1101
    %v1170 = vunpack.c.l.b16 %v1102
    %v1171 = vunpack.c.l.b16 %v1103
    %v1172 = vunpack.c.l.b16 %v1104
    %v1173 = vunpack.c.l.b16 %v1105
    %v1174 = vunpack.c.l.b16 %v1106
    %v1175 = vunpack.c.l.b16 %v1107
    %v1176 = vunpack.c.l.b16 %v1108
    %v1177 = vunpack.c.l.b16 %v1109
    %v1178 = vunpack.c.l.b16 %v1110
    %v1179 = vunpack.c.l.b16 %v1111
    %v1180 = vunpack.c.l.b16 %v1112
    %v1181 = vunpack.c.l.b16 %v1113
    %v1182 = vunpack.c.l.b16 %v1114
    %v1183 = vunpack.c.l.b16 %v1115
    %v1184 = vunpack.c.l.b16 %v1116
    %v1185 = vunpack.c.l.b16 %v1117
    %v1186 = vpack.c.b16 %v1155, %v1154
    %v1187 = vpack.c.b16 %v1157, %v1156
    %v1188 = vpack.c.b16 %v1159, %v1158
    %v1189 = vpack.c.b16 %v1161, %v1160
    %v1190 = vpack.c.b16 %v1163, %v1162
    %v1191 = vpack.c.b16 %v1165, %v1164
    %v1192 = vpack.c.b16 %v1167, %v1166
    %v1193 = vpack.c.b16 %v1169, %v1168
    %v1194 = vpack.c.b16 %v1171, %v1170
    %v1195 = vpack.c.b16 %v1173, %v1172
    %v1196 = vpack.c.b16 %v1175, %v1174
    %v1197 = vpack.c.b16 %v1177, %v1176
    %v1198 = vpack.c.b16 %v1179, %v1178
    %v1199 = vpack.c.b16 %v1181, %v1180
    %v1200 = vpack.c.b16 %v1183, %v1182
    %v1201 = vpack.c.b16 %v1185, %v1184
    %1218 = vmatpush.bf16.msra.mxu0 %v1193
    %1219 = vmatpush.bf16.msra.mxu0 %v1192
    %1220 = vmatpush.bf16.msra.mxu0 %v1191
    %1221 = vmatpush.bf16.msra.mxu0 %v1190
    %1222 = vmatpush.bf16.msra.mxu0 %v1189
    %1223 = vmatpush.bf16.msra.mxu0 %v1188
    %1224 = vmatpush.bf16.msra.mxu0 %v1187
    %1225 = vmatpush.bf16.msra.mxu0 %v1186
    %1226 = vmatmul.bf16.gmra.mxu0 %v1080
    %v1227 = vpop.f32.mrf.mxu0
    %v1228 = vadd.f32 %v1120, %v1227
    %v1229 = vpop.f32.mrf.mxu0
    %v1230 = vadd.f32 %v1120, %v1229
    %1231 = vmatmul.bf16.gmra.mxu0 %v1082
    %v1232 = vpop.f32.mrf.mxu0
    %v1233 = vadd.f32 %v1120, %v1232
    %v1234 = vpop.f32.mrf.mxu0
    %v1235 = vadd.f32 %v1120, %v1234
    %1236 = vmatmul.bf16.gmra.mxu0 %v1084
    %v1237 = vpop.f32.mrf.mxu0
    %v1238 = vadd.f32 %v1120, %v1237
    %v1239 = vpop.f32.mrf.mxu0
    %v1240 = vadd.f32 %v1120, %v1239
    %1241 = vdwg.mxu0
    %1242 = vmatpush.bf16.msra.mxu0 %v1201
    %1243 = vmatpush.bf16.msra.mxu0 %v1200
    %1244 = vmatpush.bf16.msra.mxu0 %v1199
    %1245 = vmatpush.bf16.msra.mxu0 %v1198
    %1246 = vmatpush.bf16.msra.mxu0 %v1197
    %1247 = vmatpush.bf16.msra.mxu0 %v1196
    %1248 = vmatpush.bf16.msra.mxu0 %v1195
    %1249 = vmatpush.bf16.msra.mxu0 %v1194
    %1250 = vmatmul.bf16.gmra.mxu0 %v1081
    %v1251 = vpop.f32.mrf.mxu0
    %v1252 = vadd.f32 %v1228, %v1251
    %v1253 = vpop.f32.mrf.mxu0
    %v1254 = vadd.f32 %v1230, %v1253
    %1255 = vmatmul.bf16.gmra.mxu0 %v1083
    %v1256 = vpop.f32.mrf.mxu0
    %v1257 = vadd.f32 %v1233, %v1256
    %v1258 = vpop.f32.mrf.mxu0
    %v1259 = vadd.f32 %v1235, %v1258
    %1260 = vmatmul.bf16.gmra.mxu0 %v1085
    %v1261 = vpop.f32.mrf.mxu0
    %v1262 = vadd.f32 %v1238, %v1261
    %v1263 = vpop.f32.mrf.mxu0
    %v1264 = vadd.f32 %v1240, %v1263
    %1265 = vdwg.mxu0
    %1266 = vst [vmem:[#allocation14] sm:$0xff] %v444
    %1267 = vst [vmem:[#allocation14 + $0x8] sm:$0xff] %v445
    %1268 = vst [vmem:[#allocation14 + $0x10] sm:$0xff] %v446
    %1269 = vst [vmem:[#allocation14 + $0x18] sm:$0xff] %v447
    %1270 = vst [vmem:[#allocation14 + $0x20] sm:$0xff] %v448
    %1271 = vst [vmem:[#allocation14 + $0x28] sm:$0xff] %v449
    %1272 = vst [vmem:[#allocation14 + $0x30] sm:$0xff] %v450
    %1273 = vst [vmem:[#allocation14 + $0x38] sm:$0xff] %v451
    %1274 = vst [vmem:[#allocation14 + $0x40] sm:$0xff] %v452
    %1275 = vst [vmem:[#allocation14 + $0x48] sm:$0xff] %v453
    %1276 = vst [vmem:[#allocation14 + $0x50] sm:$0xff] %v454
    %1277 = vst [vmem:[#allocation14 + $0x58] sm:$0xff] %v455
    %1278 = vst [vmem:[#allocation16] sm:$0xff] %v756
    %1279 = vst [vmem:[#allocation16 + $0x8] sm:$0xff] %v757
    %1280 = vst [vmem:[#allocation16 + $0x10] sm:$0xff] %v758
    %1281 = vst [vmem:[#allocation16 + $0x18] sm:$0xff] %v759
    %1282 = vst [vmem:[#allocation16 + $0x20] sm:$0xff] %v760
    %1283 = vst [vmem:[#allocation16 + $0x28] sm:$0xff] %v761
    %1284 = vst [vmem:[#allocation16 + $0x30] sm:$0xff] %v762
    %1285 = vst [vmem:[#allocation16 + $0x38] sm:$0xff] %v763
    %1286 = vst [vmem:[#allocation16 + $0x40] sm:$0xff] %v764
    %1287 = vst [vmem:[#allocation16 + $0x48] sm:$0xff] %v765
    %1288 = vst [vmem:[#allocation16 + $0x50] sm:$0xff] %v766
    %1289 = vst [vmem:[#allocation16 + $0x58] sm:$0xff] %v767
    %1290 = vst [vmem:[#allocation17] sm:$0xff] %v1068
    %1291 = vst [vmem:[#allocation17 + $0x8] sm:$0xff] %v1069
    %1292 = vst [vmem:[#allocation17 + $0x10] sm:$0xff] %v1070
    %1293 = vst [vmem:[#allocation17 + $0x18] sm:$0xff] %v1071
    %1294 = vst [vmem:[#allocation17 + $0x20] sm:$0xff] %v1072
    %1295 = vst [vmem:[#allocation17 + $0x28] sm:$0xff] %v1073
    %1296 = vst [vmem:[#allocation17 + $0x30] sm:$0xff] %v1074
    %1297 = vst [vmem:[#allocation17 + $0x38] sm:$0xff] %v1075
    %1298 = vst [vmem:[#allocation17 + $0x40] sm:$0xff] %v1076
    %1299 = vst [vmem:[#allocation17 + $0x48] sm:$0xff] %v1077
    %1300 = vst [vmem:[#allocation17 + $0x50] sm:$0xff] %v1078
    %1301 = vst [vmem:[#allocation17 + $0x58] sm:$0xff] %v1079
    %1302 = vst [vmem:[#allocation19] sm:$0xff] %v1252
    %1303 = vst [vmem:[#allocation19 + $0x8] sm:$0xff] %v1254
    %1304 = vst [vmem:[#allocation19 + $0x10] sm:$0xff] %v1257
    %1305 = vst [vmem:[#allocation19 + $0x18] sm:$0xff] %v1259
    %1306 = vst [vmem:[#allocation19 + $0x20] sm:$0xff] %v1262
    %1307 = vst [vmem:[#allocation19 + $0x28] sm:$0xff] %v1264
    %1308 = vmax.xlane.f32.xlu0 %v1252
    %v1309 = vpop.xlane.xlu0 %1308
    %1310 = vmax.xlane.f32.xlu0 %v1254
    %v1311 = vpop.xlane.xlu0 %1310
    %1312 = vmax.xlane.f32.xlu0 %v1257
    %v1313 = vpop.xlane.xlu0 %1312
    %1314 = vmax.xlane.f32.xlu0 %v1259
    %v1315 = vpop.xlane.xlu0 %1314
    %1316 = vmax.xlane.f32.xlu0 %v1262
    %v1317 = vpop.xlane.xlu0 %1316
    %1318 = vmax.xlane.f32.xlu0 %v1264
    %v1319 = vpop.xlane.xlu0 %1318
    %v1320 = vsub.f32 %v1252, %v1309
    %v1321 = vsub.f32 %v1254, %v1311
    %v1322 = vsub.f32 %v1257, %v1313
    %v1323 = vsub.f32 %v1259, %v1315
    %v1324 = vsub.f32 %v1262, %v1317
    %v1325 = vsub.f32 %v1264, %v1319
    %v1326 = vmul.f32 %v1320, 1.442695
    %v1327 = vpow.pop %v1326
    %v1328 = vmul.f32 %v1321, 1.442695
    %v1329 = vpow.pop %v1328
    %v1330 = vmul.f32 %v1322, 1.442695
    %v1331 = vpow.pop %v1330
    %v1332 = vmul.f32 %v1323, 1.442695
    %v1333 = vpow.pop %v1332
    %v1334 = vmul.f32 %v1324, 1.442695
    %v1335 = vpow.pop %v1334
    %v1336 = vmul.f32 %v1325, 1.442695
    %v1337 = vpow.pop %v1336
    %1338 = vadd.xlane.f32.xlu0 %v1327
    %v1339 = vpop.xlane.xlu0 %1338
    %1340 = vadd.xlane.f32.xlu0 %v1329
    %v1341 = vpop.xlane.xlu0 %1340
    %1342 = vadd.xlane.f32.xlu0 %v1331
    %v1343 = vpop.xlane.xlu0 %1342
    %1344 = vadd.xlane.f32.xlu0 %v1333
    %v1345 = vpop.xlane.xlu0 %1344
    %1346 = vadd.xlane.f32.xlu0 %v1335
    %v1347 = vpop.xlane.xlu0 %1346
    %1348 = vadd.xlane.f32.xlu0 %v1337
    %v1349 = vpop.xlane.xlu0 %1348
    %v1350 = vlog2.pop %v1339
    %v1351 = vmul.f32 %v1350, 0.6931472
    %v1352 = vlog2.pop %v1341
    %v1353 = vmul.f32 %v1352, 0.6931472
    %v1354 = vlog2.pop %v1343
    %v1355 = vmul.f32 %v1354, 0.6931472
    %v1356 = vlog2.pop %v1345
    %v1357 = vmul.f32 %v1356, 0.6931472
    %v1358 = vlog2.pop %v1347
    %v1359 = vmul.f32 %v1358, 0.6931472
    %v1360 = vlog2.pop %v1349
    %v1361 = vmul.f32 %v1360, 0.6931472
    %v1362 = vsub.f32 %v1320, %v1351
    %v1363 = vsub.f32 %v1321, %v1353
    %v1364 = vsub.f32 %v1322, %v1355
    %v1365 = vsub.f32 %v1323, %v1357
    %v1366 = vsub.f32 %v1324, %v1359
    %v1367 = vsub.f32 %v1325, %v1361
    %1368 = vst [vmem:[#allocation13] sm:$0xff] %v1362
    %1369 = vst [vmem:[#allocation13 + $0x8] sm:$0xff] %v1363
    %1370 = vst [vmem:[#allocation13 + $0x10] sm:$0xff] %v1364
    %1371 = vst [vmem:[#allocation13 + $0x18] sm:$0xff] %v1365
    %1372 = vst [vmem:[#allocation13 + $0x20] sm:$0xff] %v1366
    %1373 = vst [vmem:[#allocation13 + $0x28] sm:$0xff] %v1367
    // Predicated region
    $region62: #{tpu_custom_call.1} parent=1 // pred_check
      _
    $region63: #{tpu_custom_call.1} parent=1 // pred_check_branch
      %1375 = sbr.rel (0) target = $region65
    $region64: #{tpu_custom_call.1} parent=1 // pred_region
      %1377 = vsyncadd [#allocation4], 0
      %s1378 = sshll.u32 [#allocation13], 4
      %s1379 = int_to_ptr.vmem [resolvable:$true] %s1378
      %s1380 = sshll.u32 %s9, 4
      %s1381 = int_to_ptr.hbm [resolvable:$true] %s1380
      %1386 = dma.vmem_to_hbm [thread:$0]  %s1379, 768, %s1381, [#allocation4], 128, 128, 8
    $region65: #{tpu_custom_call.1} parent=1 // pred_fallthru
      _
    // Predicated region
    $region66: #{tpu_custom_call.1} parent=1 // pred_check
      _
    $region67: #{tpu_custom_call.1} parent=1 // pred_check_branch
      %1388 = sbr.rel (0) target = $region69
    $region68: #{tpu_custom_call.1} parent=1 // pred_region
      %1390 = vsyncadd [#allocation15], 0
      %s1391 = sshll.u32 [#allocation14], 4
      %s1392 = int_to_ptr.vmem [resolvable:$true] %s1391
      %s1393 = sshll.u32 %s10, 4
      %s1394 = int_to_ptr.hbm [resolvable:$true] %s1393
      %1399 = dma.vmem_to_hbm [thread:$0]  %s1392, 1536, %s1394, [#allocation15], 256, 256, 16
    $region69: #{tpu_custom_call.1} parent=1 // pred_fallthru
      _
    // Predicated region
    $region70: #{tpu_custom_call.1} parent=1 // pred_check
      _
    $region71: #{tpu_custom_call.1} parent=1 // pred_check_branch
      %1401 = sbr.rel (0) target = $region73
    $region72: #{tpu_custom_call.1} parent=1 // pred_region
      %1403 = vsyncadd [#allocation15], 0
      %s1404 = sshll.u32 [#allocation16], 4
      %s1405 = int_to_ptr.vmem [resolvable:$true] %s1404
      %s1406 = sshll.u32 %s11, 4
      %s1407 = int_to_ptr.hbm [resolvable:$true] %s1406
      %1412 = dma.vmem_to_hbm [thread:$0]  %s1405, 1536, %s1407, [#allocation15], 256, 256, 16
    $region73: #{tpu_custom_call.1} parent=1 // pred_fallthru
      _
    // Predicated region
    $region74: #{tpu_custom_call.1} parent=1 // pred_check
      _
    $region75: #{tpu_custom_call.1} parent=1 // pred_check_branch
      %1414 = sbr.rel (0) target = $region77
    $region76: #{tpu_custom_call.1} parent=1 // pred_region
      %1416 = vsyncadd [#allocation18], 0
      %s1417 = sshll.u32 [#allocation17], 4
      %s1418 = int_to_ptr.vmem [resolvable:$true] %s1417
      %s1419 = sshll.u32 %s12, 4
      %s1420 = int_to_ptr.hbm [resolvable:$true] %s1419
      %1425 = dma.vmem_to_hbm [thread:$0]  %s1418, 1536, %s1420, [#allocation18], 256, 256, 16
    $region77: #{tpu_custom_call.1} parent=1 // pred_fallthru
      _
    // Predicated region
    $region78: #{tpu_custom_call.1} parent=1 // pred_check
      _
    $region79: #{tpu_custom_call.1} parent=1 // pred_check_branch
      %1427 = sbr.rel (0) target = $region81
    $region80: #{tpu_custom_call.1} parent=1 // pred_region
      %1429 = vsyncadd [#allocation18], 0
      %s1430 = sshll.u32 [#allocation19], 4
      %s1431 = int_to_ptr.vmem [resolvable:$true] %s1430
      %s1432 = sshll.u32 %s13, 4
      %s1433 = int_to_ptr.hbm [resolvable:$true] %s1432
      %1438 = dma.vmem_to_hbm [thread:$0]  %s1431, 768, %s1433, [#allocation18], 128, 128, 8
    $region81: #{tpu_custom_call.1} parent=1 // pred_fallthru
      _
    // Predicated region
    $region82: #{tpu_custom_call.1} parent=1 // pred_check
      _
    $region83: #{tpu_custom_call.1} parent=1 // pred_check_branch
      %1440 = sbr.rel (0) target = $region85
    $region84: #{tpu_custom_call.1} parent=1 // pred_region
      %1442 = dma.done [#allocation4], 768
    $region85: #{tpu_custom_call.1} parent=1 // pred_fallthru
      _
    // Predicated region
    $region86: #{tpu_custom_call.1} parent=1 // pred_check
      _
    $region87: #{tpu_custom_call.1} parent=1 // pred_check_branch
      %1444 = sbr.rel (0) target = $region89
    $region88: #{tpu_custom_call.1} parent=1 // pred_region
      %1446 = dma.done [#allocation15], 1536
    $region89: #{tpu_custom_call.1} parent=1 // pred_fallthru
      _
    // Predicated region
    $region90: #{tpu_custom_call.1} parent=1 // pred_check
      _
    $region91: #{tpu_custom_call.1} parent=1 // pred_check_branch
      %1448 = sbr.rel (0) target = $region93
    $region92: #{tpu_custom_call.1} parent=1 // pred_region
      %1450 = dma.done [#allocation15], 1536
    $region93: #{tpu_custom_call.1} parent=1 // pred_fallthru
      _
    // Predicated region
    $region94: #{tpu_custom_call.1} parent=1 // pred_check
      _
    $region95: #{tpu_custom_call.1} parent=1 // pred_check_branch
      %1452 = sbr.rel (0) target = $region97
    $region96: #{tpu_custom_call.1} parent=1 // pred_region
      %1454 = dma.done [#allocation18], 1536
    $region97: #{tpu_custom_call.1} parent=1 // pred_fallthru
      _
    // Predicated region
    $region98: #{tpu_custom_call.1} parent=1 // pred_check
      _
    $region99: #{tpu_custom_call.1} parent=1 // pred_check_branch
      %1456 = sbr.rel (0) target = $region101
    $region100: #{tpu_custom_call.1} parent=1 // pred_region
      %1458 = dma.done [#allocation18], 768
    $region101: #{tpu_custom_call.1} parent=1 // pred_fallthru
      _
    %1459 = vsyncpa [#allocation3], 1
    %1460 = vsyncpa [#allocation6], 1
    %1461 = vsyncpa [#allocation9], 1
    %1462 = vsyncpa [#allocation12], 1
    %1463 = vsyncpa [#allocation4], 1
    %1464 = vsyncpa [#allocation15], 1
    %1465 = vsyncpa [#allocation18], 1

</llo_original>
